<compile_context>
chip_gen: v7x
topology: tpu7x:2x2x1
jax: 0.10.0
libtpu: 0.0.40
codegen_flags: <defaults>
</compile_context>

<pallas_src>
import jax
import jax.numpy as jnp
import numpy as np
from jax.experimental import pallas as pl
from jax.experimental.pallas import tpu as pltpu

IN_DIM = 2        # input_dim of the PyTorch MLP
H1 = 64
H2 = 16
OUT_DIM = 1       # output_dim of the PyTorch MLP

TB_MAX = 4096     # max batch tile (lanes per grid step), multiple of 128


def _round_up(a, b):
    return ((a + b - 1) // b) * b


def _choose_tb(n, tb_max=TB_MAX):
    """Batch tile (on the lane axis): multiple of 128, as big as possible.
    grid=1 for small batches; otherwise aim for 2 large steps (dual-TC v7x
    sharding; the single extra step is negligible on single-TC v5e/v6e)."""
    n128 = _round_up(max(int(n), 1), 128)
    if n128 <= 128:
        return n128
    return int(min(tb_max, _round_up(pl.cdiv(n128, 2), 128)))


def _mlp_kernel(x_ref, w1t_ref, b1_ref, w2t_ref, b2_ref, w3_ref, b3_ref,
                o_ref):
    x = x_ref[...]                                           # (2, TB)

    # Layer 1: Linear(2,64) + ReLU.  K=2 is far too small for the MXU; do it
    # as two lane-dense outer-product multiply-adds on the VPU.
    h1 = (w1t_ref[:, 0:1] * x[0:1, :] +
          w1t_ref[:, 1:2] * x[1:2, :] +
          b1_ref[...])                                       # (64, TB)
    h1 = jnp.maximum(h1, 0.0)

    # Layer 2: Linear(64,16) + ReLU on the MXU; f32 accumulation, pinned
    # precision for exact parity with the f32 reference.
    h2 = jnp.dot(w2t_ref[...], h1,
                 preferred_element_type=jnp.float32,
                 precision=jax.lax.Precision.HIGHEST)        # (16, TB)
    h2 = jnp.maximum(h2 + b2_ref[...], 0.0)

    # Layer 3: Linear(16,1).  Single output row -> VPU multiply + sublane
    # reduction; the store is a full-lane (1, TB) unmasked vst.
    o = jnp.sum(h2 * w3_ref[...], axis=0, keepdims=True) + b3_ref[...]
    o_ref[...] = o.astype(o_ref.dtype)                       # (1, TB)


def prepare_params(w1, b1, w2, b2, w3, b3):
    """One-time parameter prep (hoisted out of the per-call path).
    Inputs are [fan_in, fan_out] weights / [fan_out] biases; returns the
    feature-major forms used by the kernel."""
    return (jnp.asarray(w1, jnp.float32).reshape(IN_DIM, H1).T,   # (64, 2)
            jnp.asarray(b1, jnp.float32).reshape(H1, 1),          # (64, 1)
            jnp.asarray(w2, jnp.float32).reshape(H1, H2).T,       # (16, 64)
            jnp.asarray(b2, jnp.float32).reshape(H2, 1),          # (16, 1)
            jnp.asarray(w3, jnp.float32).reshape(H2, OUT_DIM),    # (16, 1)
            jnp.asarray(b3, jnp.float32).reshape(OUT_DIM, 1))     # (1, 1)


@jax.jit
def mlp_forward(x, w1t, b1, w2t, b2, w3, b3):
    """x: [N, IN_DIM] float32 -> [N, OUT_DIM] float32.
    Params must come from prepare_params()."""
    n = x.shape[0]
    tb = _choose_tb(n)
    n_pad = _round_up(max(n, 1), tb)

    # Feature-major transpose (tiny [N,2] array) + tail padding in one go;
    # padded columns produce garbage that is sliced off below.
    xt = jnp.asarray(x, jnp.float32).T                       # (2, N)
    if n_pad != n:
        xt = jnp.pad(xt, ((0, 0), (0, n_pad - n)))

    full = lambda shape: pl.BlockSpec(shape, lambda i: (0, 0))

    out = pl.pallas_call(
        _mlp_kernel,
        out_shape=jax.ShapeDtypeStruct((OUT_DIM, n_pad), jnp.float32),
        grid_spec=pltpu.PrefetchScalarGridSpec(
            num_scalar_prefetch=0,
            grid=(n_pad // tb,),
            in_specs=[
                pl.BlockSpec((IN_DIM, tb), lambda i: (0, i)),  # x tile
                full((H1, IN_DIM)),                            # w1^T
                full((H1, 1)),                                 # b1
                full((H2, H1)),                                # w2^T
                full((H2, 1)),                                 # b2
                full((H2, OUT_DIM)),                           # w3 column
                full((OUT_DIM, 1)),                            # b3
            ],
            out_specs=pl.BlockSpec((OUT_DIM, tb), lambda i: (0, i)),
        ),
        compiler_params=pltpu.CompilerParams(
            dimension_semantics=("parallel",)),
    )(xt, w1t, b1, w2t, b2, w3, b3)

    # (1, n_pad) -> [N, 1]; the transpose of a single-row array is a free
    # reshape.  Don't drop this slice: padded columns hold garbage.
    return out[:, :n].T


def _init_linear(key, fan_in, fan_out):
    # PyTorch nn.Linear default init: U(-1/sqrt(fan_in), 1/sqrt(fan_in))
    kw, kb = jax.random.split(key)
    bound = 1.0 / np.sqrt(fan_in)
    w = jax.random.uniform(kw, (fan_in, fan_out), jnp.float32, -bound, bound)
    b = jax.random.uniform(kb, (fan_out,), jnp.float32, -bound, bound)
    return w, b


def _reference(x, w1, b1, w2, b2, w3, b3):
    hi = jax.lax.Precision.HIGHEST
    h1 = jnp.maximum(jnp.dot(x, w1, precision=hi) + b1, 0.0)
    h2 = jnp.maximum(jnp.dot(h1, w2, precision=hi) + b2, 0.0)
    return jnp.dot(h2, w3, precision=hi) + b3


if __name__ == "__main__":
    key = jax.random.PRNGKey(0)
    kx, k1, k2, k3 = jax.random.split(key, 4)

    # Synthetic input shaped like sample_8gaussians(1024): [N, 2] float32.
    N = 1024
    x = jax.random.normal(kx, (N, IN_DIM), jnp.float32) * 5.0

    w1, b1 = _init_linear(k1, IN_DIM, H1)
    w2, b2 = _init_linear(k2, H1, H2)
    w3, b3 = _init_linear(k3, H2, OUT_DIM)

    params = prepare_params(w1, b1, w2, b2, w3, b3)  # hoisted, once

    out = jax.block_until_ready(mlp_forward(x, *params))
    ref = _reference(x, w1, b1, w2, b2, w3, b3)
    assert out.shape == (N, OUT_DIM)
    np.testing.assert_allclose(np.asarray(out), np.asarray(ref),
                               rtol=1e-5, atol=1e-5)

    # Also exercise the tail-padding path (N not a multiple of the tile).
    x2 = x[:100]
    out2 = jax.block_until_ready(mlp_forward(x2, *params))
    np.testing.assert_allclose(np.asarray(out2), np.asarray(ref[:100]),
                               rtol=1e-5, atol=1e-5)

    print("KERNEL_OK")
</pallas_src>

<mosaic_0001>
module attributes {stable_mosaic.version = 11 : i64} {
  func.func @_mlp_kernel(%arg0: i32, %arg1: memref<2x512xf32, #tpu.memory_space<vmem>>, %arg2: memref<64x2xf32, #tpu.memory_space<vmem>>, %arg3: memref<64x1xf32, #tpu.memory_space<vmem>>, %arg4: memref<16x64xf32, #tpu.memory_space<vmem>>, %arg5: memref<16x1xf32, #tpu.memory_space<vmem>>, %arg6: memref<16x1xf32, #tpu.memory_space<vmem>>, %arg7: memref<1x1xf32, #tpu.memory_space<vmem>>, %arg8: memref<1x512xf32, #tpu.memory_space<vmem>>) attributes {dimension_semantics = [#tpu.dimension_semantics<parallel>], iteration_bounds = array<i64: 2>, scalar_prefetch = 0 : i64, scratch_operands = 0 : i64, tpu.core_type = #tpu.core_type<tc>, window_params = [{transform_indices = @transform_0, window_bounds = array<i64: 2, 512>}, {pipeline_mode = #tpu.pipeline_mode<synchronous>, transform_indices = @transform_1, window_bounds = array<i64: 64, 2>}, {pipeline_mode = #tpu.pipeline_mode<synchronous>, transform_indices = @transform_2, window_bounds = array<i64: 64, 1>}, {pipeline_mode = #tpu.pipeline_mode<synchronous>, transform_indices = @transform_3, window_bounds = array<i64: 16, 64>}, {pipeline_mode = #tpu.pipeline_mode<synchronous>, transform_indices = @transform_4, window_bounds = array<i64: 16, 1>}, {pipeline_mode = #tpu.pipeline_mode<synchronous>, transform_indices = @transform_5, window_bounds = array<i64: 16, 1>}, {pipeline_mode = #tpu.pipeline_mode<synchronous>, transform_indices = @transform_6, window_bounds = array<i64: 1, 1>}, {transform_indices = @transform_7, window_bounds = array<i64: 1, 512>}]} {
    %c0 = arith.constant 0 : index
    %c0_0 = arith.constant 0 : index
    %0 = vector.load %arg1[%c0, %c0_0] : memref<2x512xf32, #tpu.memory_space<vmem>>, vector<2x512xf32>
    %c0_1 = arith.constant 0 : index
    %c0_2 = arith.constant 0 : index
    %1 = vector.load %arg2[%c0_1, %c0_2] : memref<64x2xf32, #tpu.memory_space<vmem>>, vector<64x1xf32>
    %2 = vector.extract_strided_slice %0 {offsets = [0, 0], sizes = [1, 512], strides = [1, 1]} : vector<2x512xf32> to vector<1x512xf32>
    %3 = vector.broadcast %1 : vector<64x1xf32> to vector<64x512xf32>
    %4 = vector.broadcast %2 : vector<1x512xf32> to vector<64x512xf32>
    %5 = arith.mulf %3, %4 : vector<64x512xf32>
    %c0_3 = arith.constant 0 : index
    %c1 = arith.constant 1 : index
    %6 = vector.load %arg2[%c0_3, %c1] : memref<64x2xf32, #tpu.memory_space<vmem>>, vector<64x1xf32>
    %7 = vector.extract_strided_slice %0 {offsets = [1, 0], sizes = [1, 512], strides = [1, 1]} : vector<2x512xf32> to vector<1x512xf32>
    %8 = vector.broadcast %6 : vector<64x1xf32> to vector<64x512xf32>
    %9 = vector.broadcast %7 : vector<1x512xf32> to vector<64x512xf32>
    %10 = arith.mulf %8, %9 : vector<64x512xf32>
    %11 = arith.addf %5, %10 : vector<64x512xf32>
    %c0_4 = arith.constant 0 : index
    %c0_5 = arith.constant 0 : index
    %12 = vector.load %arg3[%c0_4, %c0_5] : memref<64x1xf32, #tpu.memory_space<vmem>>, vector<64x1xf32>
    %13 = vector.broadcast %12 : vector<64x1xf32> to vector<64x512xf32>
    %14 = arith.addf %11, %13 : vector<64x512xf32>
    %cst = arith.constant 0.000000e+00 : f32
    %15 = vector.broadcast %cst : f32 to vector<64x512xf32>
    %16 = arith.maximumf %14, %15 : vector<64x512xf32>
    %c0_6 = arith.constant 0 : index
    %c0_7 = arith.constant 0 : index
    %17 = vector.load %arg4[%c0_6, %c0_7] : memref<16x64xf32, #tpu.memory_space<vmem>>, vector<16x64xf32>
    %cst_8 = arith.constant dense<0.000000e+00> : vector<16x512xf32>
    %18 = tpu.matmul %17, %16, %cst_8 {dimension_numbers = #tpu.dot_dimension_numbers<[1], [0], [0], [1], [0, 0, 1, 1], [], []>, precision = #tpu.contract_precision<fp32>} : vector<16x64xf32>, vector<64x512xf32>, vector<16x512xf32> -> vector<16x512xf32>
    %c0_9 = arith.constant 0 : index
    %c0_10 = arith.constant 0 : index
    %19 = vector.load %arg5[%c0_9, %c0_10] : memref<16x1xf32, #tpu.memory_space<vmem>>, vector<16x1xf32>
    %20 = vector.broadcast %19 : vector<16x1xf32> to vector<16x512xf32>
    %21 = arith.addf %18, %20 : vector<16x512xf32>
    %cst_11 = arith.constant 0.000000e+00 : f32
    %22 = vector.broadcast %cst_11 : f32 to vector<16x512xf32>
    %23 = arith.maximumf %21, %22 : vector<16x512xf32>
    %c0_12 = arith.constant 0 : index
    %c0_13 = arith.constant 0 : index
    %24 = vector.load %arg6[%c0_12, %c0_13] : memref<16x1xf32, #tpu.memory_space<vmem>>, vector<16x1xf32>
    %25 = vector.broadcast %24 : vector<16x1xf32> to vector<16x512xf32>
    %26 = arith.mulf %23, %25 : vector<16x512xf32>
    %cst_14 = arith.constant dense<0.000000e+00> : vector<512xf32>
    %27 = vector.multi_reduction <add>, %26, %cst_14 [0] : vector<16x512xf32> to vector<512xf32>
    %28 = vector.shape_cast %27 : vector<512xf32> to vector<1x512xf32>
    %c0_15 = arith.constant 0 : index
    %c0_16 = arith.constant 0 : index
    %29 = vector.load %arg7[%c0_15, %c0_16] : memref<1x1xf32, #tpu.memory_space<vmem>>, vector<1x1xf32>
    %30 = vector.broadcast %29 : vector<1x1xf32> to vector<1x512xf32>
    %31 = arith.addf %28, %30 : vector<1x512xf32>
    %c0_17 = arith.constant 0 : index
    %c0_18 = arith.constant 0 : index
    %32 = vector.load %arg8[%c0_17, %c0_18] : memref<1x512xf32, #tpu.memory_space<vmem>>, vector<1x512xf32>
    tpu.vector_store %arg8[%c0_17, %c0_18], %31 {strides = array<i32>} : memref<1x512xf32, #tpu.memory_space<vmem>>, vector<1x512xf32>,
    return
  }
  func.func @transform_0(%arg0: i32) -> (i32, i32) {
    %c0_i32 = arith.constant 0 : i32
    %c0_i32_0 = arith.constant 0 : i32
    return %c0_i32, %arg0 : i32, i32
  }
  func.func @transform_1(%arg0: i32) -> (i32, i32) {
    %c0_i32 = arith.constant 0 : i32
    %c0_i32_0 = arith.constant 0 : i32
    %c0_i32_1 = arith.constant 0 : i32
    return %c0_i32, %c0_i32_0 : i32, i32
  }
  func.func @transform_2(%arg0: i32) -> (i32, i32) {
    %c0_i32 = arith.constant 0 : i32
    %c0_i32_0 = arith.constant 0 : i32
    %c0_i32_1 = arith.constant 0 : i32
    return %c0_i32, %c0_i32_0 : i32, i32
  }
  func.func @transform_3(%arg0: i32) -> (i32, i32) {
    %c0_i32 = arith.constant 0 : i32
    %c0_i32_0 = arith.constant 0 : i32
    %c0_i32_1 = arith.constant 0 : i32
    return %c0_i32, %c0_i32_0 : i32, i32
  }
  func.func @transform_4(%arg0: i32) -> (i32, i32) {
    %c0_i32 = arith.constant 0 : i32
    %c0_i32_0 = arith.constant 0 : i32
    %c0_i32_1 = arith.constant 0 : i32
    return %c0_i32, %c0_i32_0 : i32, i32
  }
  func.func @transform_5(%arg0: i32) -> (i32, i32) {
    %c0_i32 = arith.constant 0 : i32
    %c0_i32_0 = arith.constant 0 : i32
    %c0_i32_1 = arith.constant 0 : i32
    return %c0_i32, %c0_i32_0 : i32, i32
  }
  func.func @transform_6(%arg0: i32) -> (i32, i32) {
    %c0_i32 = arith.constant 0 : i32
    %c0_i32_0 = arith.constant 0 : i32
    %c0_i32_1 = arith.constant 0 : i32
    return %c0_i32, %c0_i32_0 : i32, i32
  }
  func.func @transform_7(%arg0: i32) -> (i32, i32) {
    %c0_i32 = arith.constant 0 : i32
    %c0_i32_0 = arith.constant 0 : i32
    return %c0_i32, %arg0 : i32, i32
  }
}

</mosaic_0001>

<llo_original>
// kernel: mlp_forward.1
$region0: #{mlp_forward.1}
  #allocation0 [shape = 'u32[]', space=smem, size = 0x4, offset = 0x4, fixed_abs, tag = 'smem constant byte address 0x4 - core index']
  #allocation1 [shape = 'u32[144,128]{1,0:T(1,128)}', space=vmem, size = 0x12000, scoped, tag = 'internal scratch']
  #allocation2 [shape = 'f32[1,1]{1,0:T(1,128)S(1)}', space=vmem, size = 0x200, scoped, tag = 'scoped memory for mlp_forward.1']
  %s0 = inlined_call_operand.vmem [shape: f32[2,1024], index: 0, kind: input, shape index: {}]
  %s1 = inlined_call_operand.vmem [shape: f32[64,2], index: 1, kind: input, shape index: {}]
  %s2 = inlined_call_operand.vmem [shape: f32[64,1], index: 2, kind: input, shape index: {}]
  %s3 = inlined_call_operand.vmem [shape: f32[16,64], index: 3, kind: input, shape index: {}]
  %s4 = inlined_call_operand.vmem [shape: f32[16,1], index: 4, kind: input, shape index: {}]
  %s5 = inlined_call_operand.vmem [shape: f32[16,1], index: 5, kind: input, shape index: {}]
  %s6 = inlined_call_operand.<no memory space> [shape: f32[1,1], index: 6, kind: input, shape index: {}]
  %s7 = inlined_call_operand.hbm [shape: f32[1,1024], index: 7, kind: output, shape index: {}]
  %s8 = sld [smem:[#allocation0]]
  $region61: #{mlp_forward.1} parent=0
    _
  %s10 = ssub.s32 1, %s8
  %s11 = scalar_select 0, %s10, %s8
  %v12 = vstv %s6
  %13 = vst [vmem:[#allocation2] sm:$0x1] %v12
  $region1: #{mlp_forward.1} parent=0
    #allocation3 [shape = 'u8[4096]{0}', space=vmem, size = 0x1000, scoped, tag = 'output window, operand 0']
    #allocation4 [shape = 's32[2]{0}', space=sflag, size = 0x8, scoped, tag = 'scoped memory for mlp_forward.1']
    %14 = vsyncpa [#allocation4], 0
    %s15 = scalar_lea.sflag [#allocation4], 1
    %16 = vsyncpa %s15, 0
    loop: start=0, step=1, limit=4
    $region2: #{mlp_forward.1} parent=1 // loop_pre_header
      _
    $region3: #{mlp_forward.1} parent=1 // loop_header
      %s18 = sphi 0, %s22
      %p19 = scmp.ge.s32.totalorder %s18, 4
      %s28 = sphi 0, %s30
      %s31 = sphi 0, %s28
      %s32 = sphi 0, %s31
      %s48 = sphi 0, %s32
      %s52 = sphi 0, %s52
      %s54 = sphi 0, %s52
      %s55 = sphi 0, %s54
      %s69 = sphi 0, %s55
      %s73 = sphi 0, %s73
      %s75 = sphi 0, %s73
      %s76 = sphi 0, %s75
      %s90 = sphi 0, %s76
      %s94 = sphi 0, %s94
      %s96 = sphi 0, %s94
      %s97 = sphi 0, %s96
      %s111 = sphi 0, %s97
      %s115 = sphi 0, %s115
      %s117 = sphi 0, %s115
      %s118 = sphi 0, %s117
      %s132 = sphi 0, %s118
      %s136 = sphi 0, %s136
      %s138 = sphi 0, %s136
      %s139 = sphi 0, %s138
      %s153 = sphi 0, %s139
      %s157 = sphi 0, %s157
      %s159 = sphi 0, %s157
      %s160 = sphi 0, %s159
      %s174 = sphi 0, %s160
      %s180 = sphi 0, %s182
      %s183 = sphi 0, %s180
      %s184 = sphi 0, %s183
      %s200 = sphi 0, %s184
    $region4: #{mlp_forward.1} parent=1 // loop_header_branch
      %21 = sbr.rel (%p19) target = $region8
    $region5: #{mlp_forward.1} parent=1 // loop_body
      %s23 = ssub.s32 %s18, 1
      %s24 = ssub.s32 %s18, 2
      %s25 = sadd.s32 %s18, 1
      %s26 = ssub.s32 %s18, %s25
      %p27 = scmp.eq.s32.totalorder %s26, 0
      %s29 = sadd.s32 %s28, 1
      %s30 = scalar_select %p27, %s28, %s29
      %p33 = pneg %p27
      %p34 = scmp.eq.s32.totalorder %s18, 1
      %p35 = por %p33, %p34
      %p36 = scmp.ne.s32.totalorder %s28, %s31
      %p37 = scmp.eq.s32.totalorder %s18, 0
      %p38 = por %p36, %p37
      %p39 = scmp.ne.s32.totalorder %s28, %s31
      %p40 = scmp.eq.s32.totalorder %s23, 1
      %p41 = por %p39, %p40
      %p42 = scmp.ne.s32.totalorder %s31, %s32
      %p43 = scmp.eq.s32.totalorder %s23, 0
      %p44 = por %p42, %p43
      %p45 = scmp.ne.s32.totalorder %s31, %s32
      %p46 = scmp.eq.s32.totalorder %s24, 1
      %p47 = por %p45, %p46
      %p49 = scmp.ne.s32.totalorder %s32, %s48
      %p50 = scmp.eq.s32.totalorder %s24, 0
      %p51 = por %p49, %p50
      %s53 = sadd.s32 %s52, 1
      %p56 = scmp.eq.s32.totalorder %s18, 1
      %p57 = scmp.ne.s32.totalorder %s52, %s54
      %p58 = scmp.eq.s32.totalorder %s18, 0
      %p59 = por %p57, %p58
      %p60 = scmp.ne.s32.totalorder %s52, %s54
      %p61 = scmp.eq.s32.totalorder %s23, 1
      %p62 = por %p60, %p61
      %p63 = scmp.ne.s32.totalorder %s54, %s55
      %p64 = scmp.eq.s32.totalorder %s23, 0
      %p65 = por %p63, %p64
      %p66 = scmp.ne.s32.totalorder %s54, %s55
      %p67 = scmp.eq.s32.totalorder %s24, 1
      %p68 = por %p66, %p67
      %p70 = scmp.ne.s32.totalorder %s55, %s69
      %p71 = scmp.eq.s32.totalorder %s24, 0
      %p72 = por %p70, %p71
      %s74 = sadd.s32 %s73, 1
      %p77 = scmp.eq.s32.totalorder %s18, 1
      %p78 = scmp.ne.s32.totalorder %s73, %s75
      %p79 = scmp.eq.s32.totalorder %s18, 0
      %p80 = por %p78, %p79
      %p81 = scmp.ne.s32.totalorder %s73, %s75
      %p82 = scmp.eq.s32.totalorder %s23, 1
      %p83 = por %p81, %p82
      %p84 = scmp.ne.s32.totalorder %s75, %s76
      %p85 = scmp.eq.s32.totalorder %s23, 0
      %p86 = por %p84, %p85
      %p87 = scmp.ne.s32.totalorder %s75, %s76
      %p88 = scmp.eq.s32.totalorder %s24, 1
      %p89 = por %p87, %p88
      %p91 = scmp.ne.s32.totalorder %s76, %s90
      %p92 = scmp.eq.s32.totalorder %s24, 0
      %p93 = por %p91, %p92
      %s95 = sadd.s32 %s94, 1
      %p98 = scmp.eq.s32.totalorder %s18, 1
      %p99 = scmp.ne.s32.totalorder %s94, %s96
      %p100 = scmp.eq.s32.totalorder %s18, 0
      %p101 = por %p99, %p100
      %p102 = scmp.ne.s32.totalorder %s94, %s96
      %p103 = scmp.eq.s32.totalorder %s23, 1
      %p104 = por %p102, %p103
      %p105 = scmp.ne.s32.totalorder %s96, %s97
      %p106 = scmp.eq.s32.totalorder %s23, 0
      %p107 = por %p105, %p106
      %p108 = scmp.ne.s32.totalorder %s96, %s97
      %p109 = scmp.eq.s32.totalorder %s24, 1
      %p110 = por %p108, %p109
      %p112 = scmp.ne.s32.totalorder %s97, %s111
      %p113 = scmp.eq.s32.totalorder %s24, 0
      %p114 = por %p112, %p113
      %s116 = sadd.s32 %s115, 1
      %p119 = scmp.eq.s32.totalorder %s18, 1
      %p120 = scmp.ne.s32.totalorder %s115, %s117
      %p121 = scmp.eq.s32.totalorder %s18, 0
      %p122 = por %p120, %p121
      %p123 = scmp.ne.s32.totalorder %s115, %s117
      %p124 = scmp.eq.s32.totalorder %s23, 1
      %p125 = por %p123, %p124
      %p126 = scmp.ne.s32.totalorder %s117, %s118
      %p127 = scmp.eq.s32.totalorder %s23, 0
      %p128 = por %p126, %p127
      %p129 = scmp.ne.s32.totalorder %s117, %s118
      %p130 = scmp.eq.s32.totalorder %s24, 1
      %p131 = por %p129, %p130
      %p133 = scmp.ne.s32.totalorder %s118, %s132
      %p134 = scmp.eq.s32.totalorder %s24, 0
      %p135 = por %p133, %p134
      %s137 = sadd.s32 %s136, 1
      %p140 = scmp.eq.s32.totalorder %s18, 1
      %p141 = scmp.ne.s32.totalorder %s136, %s138
      %p142 = scmp.eq.s32.totalorder %s18, 0
      %p143 = por %p141, %p142
      %p144 = scmp.ne.s32.totalorder %s136, %s138
      %p145 = scmp.eq.s32.totalorder %s23, 1
      %p146 = por %p144, %p145
      %p147 = scmp.ne.s32.totalorder %s138, %s139
      %p148 = scmp.eq.s32.totalorder %s23, 0
      %p149 = por %p147, %p148
      %p150 = scmp.ne.s32.totalorder %s138, %s139
      %p151 = scmp.eq.s32.totalorder %s24, 1
      %p152 = por %p150, %p151
      %p154 = scmp.ne.s32.totalorder %s139, %s153
      %p155 = scmp.eq.s32.totalorder %s24, 0
      %p156 = por %p154, %p155
      %s158 = sadd.s32 %s157, 1
      %p161 = scmp.eq.s32.totalorder %s18, 1
      %p162 = scmp.ne.s32.totalorder %s157, %s159
      %p163 = scmp.eq.s32.totalorder %s18, 0
      %p164 = por %p162, %p163
      %p165 = scmp.ne.s32.totalorder %s157, %s159
      %p166 = scmp.eq.s32.totalorder %s23, 1
      %p167 = por %p165, %p166
      %p168 = scmp.ne.s32.totalorder %s159, %s160
      %p169 = scmp.eq.s32.totalorder %s23, 0
      %p170 = por %p168, %p169
      %p171 = scmp.ne.s32.totalorder %s159, %s160
      %p172 = scmp.eq.s32.totalorder %s24, 1
      %p173 = por %p171, %p172
      %p175 = scmp.ne.s32.totalorder %s160, %s174
      %p176 = scmp.eq.s32.totalorder %s24, 0
      %p177 = por %p175, %p176
      %s178 = ssub.s32 %s18, %s25
      %p179 = scmp.eq.s32.totalorder %s178, 0
      %s181 = sadd.s32 %s180, 1
      %s182 = scalar_select %p179, %s180, %s181
      %p185 = pneg %p179
      %p186 = scmp.eq.s32.totalorder %s18, 1
      %p187 = por %p185, %p186
      %p188 = scmp.ne.s32.totalorder %s180, %s183
      %p189 = scmp.eq.s32.totalorder %s18, 0
      %p190 = por %p188, %p189
      %p191 = scmp.ne.s32.totalorder %s180, %s183
      %p192 = scmp.eq.s32.totalorder %s23, 1
      %p193 = por %p191, %p192
      %p194 = scmp.ne.s32.totalorder %s183, %s184
      %p195 = scmp.eq.s32.totalorder %s23, 0
      %p196 = por %p194, %p195
      %p197 = scmp.ne.s32.totalorder %s183, %s184
      %p198 = scmp.eq.s32.totalorder %s24, 1
      %p199 = por %p197, %p198
      %p201 = scmp.ne.s32.totalorder %s184, %s200
      %p202 = scmp.eq.s32.totalorder %s24, 0
      %p203 = por %p201, %p202
      %p204 = scmp.le.s32.totalorder 1, %s18
      %p205 = scmp.lt.s32.totalorder %s18, 3
      %p206 = pnand %p204, %p205
      %p207 = pneg %p206
      // Predicated region
      $region9: #{mlp_forward.1} parent=5 // pred_check
        _
      $region10: #{mlp_forward.1} parent=5 // pred_check_branch
        %209 = sbr.rel (%p206) target = $region12
      $region11: #{mlp_forward.1} parent=5 // pred_region
        %s210 = ssub.s32 %s18, 1
        // Predicated region
        $region13: #{mlp_forward.1} parent=11 // pred_check
          %p211 = pneg %p65
        $region14: #{mlp_forward.1} parent=11 // pred_check_branch
          %213 = sbr.rel (%p211) target = $region16
        $region15: #{mlp_forward.1} parent=11 // pred_region
          _
        $region16: #{mlp_forward.1} parent=11 // pred_fallthru
          _
        // Predicated region
        $region17: #{mlp_forward.1} parent=11 // pred_check
          %p214 = pneg %p86
        $region18: #{mlp_forward.1} parent=11 // pred_check_branch
          %216 = sbr.rel (%p214) target = $region20
        $region19: #{mlp_forward.1} parent=11 // pred_region
          _
        $region20: #{mlp_forward.1} parent=11 // pred_fallthru
          _
        // Predicated region
        $region21: #{mlp_forward.1} parent=11 // pred_check
          %p217 = pneg %p107
        $region22: #{mlp_forward.1} parent=11 // pred_check_branch
          %219 = sbr.rel (%p217) target = $region24
        $region23: #{mlp_forward.1} parent=11 // pred_region
          _
        $region24: #{mlp_forward.1} parent=11 // pred_fallthru
          _
        // Predicated region
        $region25: #{mlp_forward.1} parent=11 // pred_check
          %p220 = pneg %p128
        $region26: #{mlp_forward.1} parent=11 // pred_check_branch
          %222 = sbr.rel (%p220) target = $region28
        $region27: #{mlp_forward.1} parent=11 // pred_region
          _
        $region28: #{mlp_forward.1} parent=11 // pred_fallthru
          _
        // Predicated region
        $region29: #{mlp_forward.1} parent=11 // pred_check
          %p223 = pneg %p149
        $region30: #{mlp_forward.1} parent=11 // pred_check_branch
          %225 = sbr.rel (%p223) target = $region32
        $region31: #{mlp_forward.1} parent=11 // pred_region
          _
        $region32: #{mlp_forward.1} parent=11 // pred_fallthru
          _
        // Predicated region
        $region33: #{mlp_forward.1} parent=11 // pred_check
          %p226 = pneg %p170
        $region34: #{mlp_forward.1} parent=11 // pred_check_branch
          %228 = sbr.rel (%p226) target = $region36
        $region35: #{mlp_forward.1} parent=11 // pred_region
          _
        $region36: #{mlp_forward.1} parent=11 // pred_fallthru
          _
      $region12: #{mlp_forward.1} parent=5 // pred_fallthru
        _
      %p229 = scmp.lt.s32.totalorder %s18, 2
      // Predicated region
      $region37: #{mlp_forward.1} parent=5 // pred_check
        %p230 = pneg %p229
      $region38: #{mlp_forward.1} parent=5 // pred_check_branch
        %232 = sbr.rel (%p230) target = $region40
      $region39: #{mlp_forward.1} parent=5 // pred_region
        // Predicated region
        $region41: #{mlp_forward.1} parent=39 // pred_check
          %p233 = pneg %p38
        $region42: #{mlp_forward.1} parent=39 // pred_check_branch
          %235 = sbr.rel (%p233) target = $region44
        $region43: #{mlp_forward.1} parent=39 // pred_region
          %s236 = smul.u32 4, %s18
          %p237 = scmp.lt.s32.totalorder %s236, 7
          %s238 = scalar_select %p237, %s236, 7
          %s239 = smul.addr %s238, 2
          %s240 = scalar_lea.vmem %s0, %s239
          %s241 = smul.u32 4, %s18
        $region44: #{mlp_forward.1} parent=39 // pred_fallthru
          _
      $region40: #{mlp_forward.1} parent=5 // pred_fallthru
        _
      %p242 = scmp.le.s32.totalorder 1, %s18
      %p243 = scmp.lt.s32.totalorder %s18, 3
      %p244 = pnand %p242, %p243
      %p245 = pneg %p244
      // Predicated region
      $region45: #{mlp_forward.1} parent=5 // pred_check
        _
      $region46: #{mlp_forward.1} parent=5 // pred_check_branch
        %247 = sbr.rel (%p244) target = $region48
      $region47: #{mlp_forward.1} parent=5 // pred_region
        %s248 = ssub.s32 %s18, 1
        %s249 = smul.u32 4, %s23
        %p250 = scmp.lt.s32.totalorder %s249, 7
        %s251 = scalar_select %p250, %s249, 7
        %s252 = smul.addr %s251, 2
        %s253 = scalar_lea.vmem %s0, %s252
        %p254 = pneg %p44
        %p255 = pneg %p41
        %p256 = pneg %p65
        %p257 = pneg %p62
        %p258 = pneg %p86
        %p259 = pneg %p83
        %p260 = pneg %p107
        %p261 = pneg %p104
        %p262 = pneg %p128
        %p263 = pneg %p125
        %p264 = pneg %p149
        %p265 = pneg %p146
        %p266 = pneg %p170
        %p267 = pneg %p167
        %p268 = pneg %p196
        %p269 = pneg %p193
        %s270 = sand.u32 %s183, 1
        %s271 = scalar_lea.sflag [#allocation4], %s270
        %s272 = sand.u32 %s183, 1
        %s273 = smul.addr %s272, 4
        %s274 = scalar_lea.vmem [#allocation3], %s273
        %s275 = smul.u32 4, %s23
        %p276 = scmp.lt.s32.totalorder %s275, 7
        %s277 = scalar_select %p276, %s275, 7
        %s278 = smul.addr %s277, 2
        %s279 = scalar_lea.vmem %s0, %s278
        %s280 = smul.u32 4, %s23
        %s281 = smul.u32 4, %s23
        %v282 = vld [vmem:[%s279] sm:$0xff]
        %v283 = vld [vmem:[%s1] sm:$0xff]
        %v284 = vld [vmem:[%s1 + $0x8] sm:$0xff]
        %v285 = vld [vmem:[%s1 + $0x10] sm:$0xff]
        %v286 = vld [vmem:[%s1 + $0x18] sm:$0xff]
        %v287 = vld [vmem:[%s1 + $0x20] sm:$0xff]
        %v288 = vld [vmem:[%s1 + $0x28] sm:$0xff]
        %v289 = vld [vmem:[%s1 + $0x30] sm:$0xff]
        %v290 = vld [vmem:[%s1 + $0x38] sm:$0xff]
        %292 = vset.pattern.permute.xlu0 0
        %293 = vperm.xlu0 %292, %v283
        %v294 = vpop.permute.xlu0 %293
        %297 = vset.pattern.permute.xlu0 0
        %298 = vperm.xlu0 %297, %v284
        %v299 = vpop.permute.xlu0 %298
        %302 = vset.pattern.permute.xlu0 0
        %303 = vperm.xlu0 %302, %v285
        %v304 = vpop.permute.xlu0 %303
        %307 = vset.pattern.permute.xlu0 0
        %308 = vperm.xlu0 %307, %v286
        %v309 = vpop.permute.xlu0 %308
        %312 = vset.pattern.permute.xlu0 0
        %313 = vperm.xlu0 %312, %v287
        %v314 = vpop.permute.xlu0 %313
        %317 = vset.pattern.permute.xlu0 0
        %318 = vperm.xlu0 %317, %v288
        %v319 = vpop.permute.xlu0 %318
        %322 = vset.pattern.permute.xlu0 0
        %323 = vperm.xlu0 %322, %v289
        %v324 = vpop.permute.xlu0 %323
        %327 = vset.pattern.permute.xlu0 0
        %328 = vperm.xlu0 %327, %v290
        %v329 = vpop.permute.xlu0 %328
        %v332 = vlaneseq
        %v333 = vshrl.u32 %v332, 7
        %v334 = vsub.s32 0, %v333
        %v335 = vrot.slane %v282, %v334
        %v336 = vlaneseq
        %v337 = vshrl.u32 %v336, 7
        %v338 = vsub.s32 2, %v337
        %v339 = vrot.slane %v282, %v338
        %v340 = vlaneseq
        %v341 = vshrl.u32 %v340, 7
        %v342 = vsub.s32 4, %v341
        %v343 = vrot.slane %v282, %v342
        %v344 = vlaneseq
        %v345 = vshrl.u32 %v344, 7
        %v346 = vsub.s32 6, %v345
        %v347 = vrot.slane %v282, %v346
        %v352 = vlaneseq
        %v353 = vshrl.u32 %v352, 7
        %v354 = vsub.s32 0, %v353
        %v355 = vrot.slane %v335, %v354
        %v356 = vlaneseq
        %v357 = vshrl.u32 %v356, 7
        %v358 = vsub.s32 0, %v357
        %v359 = vrot.slane %v339, %v358
        %v360 = vlaneseq
        %v361 = vshrl.u32 %v360, 7
        %v362 = vsub.s32 0, %v361
        %v363 = vrot.slane %v343, %v362
        %v364 = vlaneseq
        %v365 = vshrl.u32 %v364, 7
        %v366 = vsub.s32 0, %v365
        %v367 = vrot.slane %v347, %v366
        %v368 = vmul.f32 %v294, %v355
        %v369 = vmul.f32 %v294, %v359
        %v370 = vmul.f32 %v294, %v363
        %v371 = vmul.f32 %v294, %v367
        %v372 = vmul.f32 %v299, %v355
        %v373 = vmul.f32 %v299, %v359
        %v374 = vmul.f32 %v299, %v363
        %v375 = vmul.f32 %v299, %v367
        %v376 = vmul.f32 %v304, %v355
        %v377 = vmul.f32 %v304, %v359
        %v378 = vmul.f32 %v304, %v363
        %v379 = vmul.f32 %v304, %v367
        %v380 = vmul.f32 %v309, %v355
        %v381 = vmul.f32 %v309, %v359
        %v382 = vmul.f32 %v309, %v363
        %v383 = vmul.f32 %v309, %v367
        %v384 = vmul.f32 %v314, %v355
        %v385 = vmul.f32 %v314, %v359
        %v386 = vmul.f32 %v314, %v363
        %v387 = vmul.f32 %v314, %v367
        %v388 = vmul.f32 %v319, %v355
        %v389 = vmul.f32 %v319, %v359
        %v390 = vmul.f32 %v319, %v363
        %v391 = vmul.f32 %v319, %v367
        %v392 = vmul.f32 %v324, %v355
        %v393 = vmul.f32 %v324, %v359
        %v394 = vmul.f32 %v324, %v363
        %v395 = vmul.f32 %v324, %v367
        %v396 = vmul.f32 %v329, %v355
        %v397 = vmul.f32 %v329, %v359
        %v398 = vmul.f32 %v329, %v363
        %v399 = vmul.f32 %v329, %v367
        %400 = vset.pattern.permute.xlu0 1
        %401 = vperm.xlu0 %400, %v283
        %v402 = vpop.permute.xlu0 %401
        %404 = vset.pattern.permute.xlu0 1
        %405 = vperm.xlu0 %404, %v284
        %v406 = vpop.permute.xlu0 %405
        %408 = vset.pattern.permute.xlu0 1
        %409 = vperm.xlu0 %408, %v285
        %v410 = vpop.permute.xlu0 %409
        %412 = vset.pattern.permute.xlu0 1
        %413 = vperm.xlu0 %412, %v286
        %v414 = vpop.permute.xlu0 %413
        %416 = vset.pattern.permute.xlu0 1
        %417 = vperm.xlu0 %416, %v287
        %v418 = vpop.permute.xlu0 %417
        %420 = vset.pattern.permute.xlu0 1
        %421 = vperm.xlu0 %420, %v288
        %v422 = vpop.permute.xlu0 %421
        %424 = vset.pattern.permute.xlu0 1
        %425 = vperm.xlu0 %424, %v289
        %v426 = vpop.permute.xlu0 %425
        %428 = vset.pattern.permute.xlu0 1
        %429 = vperm.xlu0 %428, %v290
        %v430 = vpop.permute.xlu0 %429
        %v432 = vlaneseq
        %v433 = vshrl.u32 %v432, 7
        %v434 = vsub.s32 1, %v433
        %v435 = vrot.slane %v282, %v434
        %v436 = vlaneseq
        %v437 = vshrl.u32 %v436, 7
        %v438 = vsub.s32 3, %v437
        %v439 = vrot.slane %v282, %v438
        %v440 = vlaneseq
        %v441 = vshrl.u32 %v440, 7
        %v442 = vsub.s32 5, %v441
        %v443 = vrot.slane %v282, %v442
        %v444 = vlaneseq
        %v445 = vshrl.u32 %v444, 7
        %v446 = vsub.s32 7, %v445
        %v447 = vrot.slane %v282, %v446
        %v452 = vlaneseq
        %v453 = vshrl.u32 %v452, 7
        %v454 = vsub.s32 1, %v453
        %v455 = vrot.slane %v435, %v454
        %v456 = vlaneseq
        %v457 = vshrl.u32 %v456, 7
        %v458 = vsub.s32 1, %v457
        %v459 = vrot.slane %v439, %v458
        %v460 = vlaneseq
        %v461 = vshrl.u32 %v460, 7
        %v462 = vsub.s32 1, %v461
        %v463 = vrot.slane %v443, %v462
        %v464 = vlaneseq
        %v465 = vshrl.u32 %v464, 7
        %v466 = vsub.s32 1, %v465
        %v467 = vrot.slane %v447, %v466
        %v468 = vmul.f32 %v402, %v455
        %v469 = vmul.f32 %v402, %v459
        %v470 = vmul.f32 %v402, %v463
        %v471 = vmul.f32 %v402, %v467
        %v472 = vmul.f32 %v406, %v455
        %v473 = vmul.f32 %v406, %v459
        %v474 = vmul.f32 %v406, %v463
        %v475 = vmul.f32 %v406, %v467
        %v476 = vmul.f32 %v410, %v455
        %v477 = vmul.f32 %v410, %v459
        %v478 = vmul.f32 %v410, %v463
        %v479 = vmul.f32 %v410, %v467
        %v480 = vmul.f32 %v414, %v455
        %v481 = vmul.f32 %v414, %v459
        %v482 = vmul.f32 %v414, %v463
        %v483 = vmul.f32 %v414, %v467
        %v484 = vmul.f32 %v418, %v455
        %v485 = vmul.f32 %v418, %v459
        %v486 = vmul.f32 %v418, %v463
        %v487 = vmul.f32 %v418, %v467
        %v488 = vmul.f32 %v422, %v455
        %v489 = vmul.f32 %v422, %v459
        %v490 = vmul.f32 %v422, %v463
        %v491 = vmul.f32 %v422, %v467
        %v492 = vmul.f32 %v426, %v455
        %v493 = vmul.f32 %v426, %v459
        %v494 = vmul.f32 %v426, %v463
        %v495 = vmul.f32 %v426, %v467
        %v496 = vmul.f32 %v430, %v455
        %v497 = vmul.f32 %v430, %v459
        %v498 = vmul.f32 %v430, %v463
        %v499 = vmul.f32 %v430, %v467
        %v500 = vadd.f32 %v368, %v468
        %v501 = vadd.f32 %v369, %v469
        %v502 = vadd.f32 %v370, %v470
        %v503 = vadd.f32 %v371, %v471
        %v504 = vadd.f32 %v372, %v472
        %v505 = vadd.f32 %v373, %v473
        %v506 = vadd.f32 %v374, %v474
        %v507 = vadd.f32 %v375, %v475
        %v508 = vadd.f32 %v376, %v476
        %v509 = vadd.f32 %v377, %v477
        %v510 = vadd.f32 %v378, %v478
        %v511 = vadd.f32 %v379, %v479
        %v512 = vadd.f32 %v380, %v480
        %v513 = vadd.f32 %v381, %v481
        %v514 = vadd.f32 %v382, %v482
        %v515 = vadd.f32 %v383, %v483
        %v516 = vadd.f32 %v384, %v484
        %v517 = vadd.f32 %v385, %v485
        %v518 = vadd.f32 %v386, %v486
        %v519 = vadd.f32 %v387, %v487
        %v520 = vadd.f32 %v388, %v488
        %v521 = vadd.f32 %v389, %v489
        %v522 = vadd.f32 %v390, %v490
        %v523 = vadd.f32 %v391, %v491
        %v524 = vadd.f32 %v392, %v492
        %v525 = vadd.f32 %v393, %v493
        %v526 = vadd.f32 %v394, %v494
        %v527 = vadd.f32 %v395, %v495
        %v528 = vadd.f32 %v396, %v496
        %v529 = vadd.f32 %v397, %v497
        %v530 = vadd.f32 %v398, %v498
        %v531 = vadd.f32 %v399, %v499
        %v532 = vld [vmem:[%s2] sm:$0xff]
        %v533 = vld [vmem:[%s2 + $0x8] sm:$0xff]
        %v534 = vld [vmem:[%s2 + $0x10] sm:$0xff]
        %v535 = vld [vmem:[%s2 + $0x18] sm:$0xff]
        %v536 = vld [vmem:[%s2 + $0x20] sm:$0xff]
        %v537 = vld [vmem:[%s2 + $0x28] sm:$0xff]
        %v538 = vld [vmem:[%s2 + $0x30] sm:$0xff]
        %v539 = vld [vmem:[%s2 + $0x38] sm:$0xff]
        %541 = vset.pattern.permute.xlu0 0
        %542 = vperm.xlu0 %541, %v532
        %v543 = vpop.permute.xlu0 %542
        %546 = vset.pattern.permute.xlu0 0
        %547 = vperm.xlu0 %546, %v533
        %v548 = vpop.permute.xlu0 %547
        %551 = vset.pattern.permute.xlu0 0
        %552 = vperm.xlu0 %551, %v534
        %v553 = vpop.permute.xlu0 %552
        %556 = vset.pattern.permute.xlu0 0
        %557 = vperm.xlu0 %556, %v535
        %v558 = vpop.permute.xlu0 %557
        %561 = vset.pattern.permute.xlu0 0
        %562 = vperm.xlu0 %561, %v536
        %v563 = vpop.permute.xlu0 %562
        %566 = vset.pattern.permute.xlu0 0
        %567 = vperm.xlu0 %566, %v537
        %v568 = vpop.permute.xlu0 %567
        %571 = vset.pattern.permute.xlu0 0
        %572 = vperm.xlu0 %571, %v538
        %v573 = vpop.permute.xlu0 %572
        %576 = vset.pattern.permute.xlu0 0
        %577 = vperm.xlu0 %576, %v539
        %v578 = vpop.permute.xlu0 %577
        %v580 = vadd.f32 %v500, %v543
        %v581 = vadd.f32 %v501, %v543
        %v582 = vadd.f32 %v502, %v543
        %v583 = vadd.f32 %v503, %v543
        %v584 = vadd.f32 %v504, %v548
        %v585 = vadd.f32 %v505, %v548
        %v586 = vadd.f32 %v506, %v548
        %v587 = vadd.f32 %v507, %v548
        %v588 = vadd.f32 %v508, %v553
        %v589 = vadd.f32 %v509, %v553
        %v590 = vadd.f32 %v510, %v553
        %v591 = vadd.f32 %v511, %v553
        %v592 = vadd.f32 %v512, %v558
        %v593 = vadd.f32 %v513, %v558
        %v594 = vadd.f32 %v514, %v558
        %v595 = vadd.f32 %v515, %v558
        %v596 = vadd.f32 %v516, %v563
        %v597 = vadd.f32 %v517, %v563
        %v598 = vadd.f32 %v518, %v563
        %v599 = vadd.f32 %v519, %v563
        %v600 = vadd.f32 %v520, %v568
        %v601 = vadd.f32 %v521, %v568
        %v602 = vadd.f32 %v522, %v568
        %v603 = vadd.f32 %v523, %v568
        %v604 = vadd.f32 %v524, %v573
        %v605 = vadd.f32 %v525, %v573
        %v606 = vadd.f32 %v526, %v573
        %v607 = vadd.f32 %v527, %v573
        %v608 = vadd.f32 %v528, %v578
        %v609 = vadd.f32 %v529, %v578
        %v610 = vadd.f32 %v530, %v578
        %v611 = vadd.f32 %v531, %v578
        %v612 = vmax.f32 %v580, 0.0
        %v613 = vmax.f32 %v581, 0.0
        %v614 = vmax.f32 %v582, 0.0
        %v615 = vmax.f32 %v583, 0.0
        %v616 = vmax.f32 %v584, 0.0
        %v617 = vmax.f32 %v585, 0.0
        %v618 = vmax.f32 %v586, 0.0
        %v619 = vmax.f32 %v587, 0.0
        %v620 = vmax.f32 %v588, 0.0
        %v621 = vmax.f32 %v589, 0.0
        %v622 = vmax.f32 %v590, 0.0
        %v623 = vmax.f32 %v591, 0.0
        %v624 = vmax.f32 %v592, 0.0
        %v625 = vmax.f32 %v593, 0.0
        %v626 = vmax.f32 %v594, 0.0
        %v627 = vmax.f32 %v595, 0.0
        %v628 = vmax.f32 %v596, 0.0
        %v629 = vmax.f32 %v597, 0.0
        %v630 = vmax.f32 %v598, 0.0
        %v631 = vmax.f32 %v599, 0.0
        %v632 = vmax.f32 %v600, 0.0
        %v633 = vmax.f32 %v601, 0.0
        %v634 = vmax.f32 %v602, 0.0
        %v635 = vmax.f32 %v603, 0.0
        %v636 = vmax.f32 %v604, 0.0
        %v637 = vmax.f32 %v605, 0.0
        %v638 = vmax.f32 %v606, 0.0
        %v639 = vmax.f32 %v607, 0.0
        %v640 = vmax.f32 %v608, 0.0
        %v641 = vmax.f32 %v609, 0.0
        %v642 = vmax.f32 %v610, 0.0
        %v643 = vmax.f32 %v611, 0.0
        %v644 = vld [vmem:[%s3] sm:$0xff]
        %v645 = vld [vmem:[%s3 + $0x8] sm:$0xff]
        %v646 = vld [vmem:[%s4] sm:$0xff]
        %v647 = vld [vmem:[%s4 + $0x8] sm:$0xff]
        %649 = vset.pattern.permute.xlu0 0
        %650 = vperm.xlu0 %649, %v646
        %v651 = vpop.permute.xlu0 %650
        %654 = vset.pattern.permute.xlu0 0
        %655 = vperm.xlu0 %654, %v647
        %v656 = vpop.permute.xlu0 %655
        %vm658 = vcmask 523264
        %v660 = vsel %vm658, %v644, 0
        %v663 = vsel %vm658, %v645, 0
        %v665 = vand.u32 %v613, 4294901760
        %666 = vmatprep.subr.mxu0 %v665
        %v667 = vand.u32 %v612, 4294901760
        %668 = vmatpush1.msra.mxu0 %v667
        %v669 = vand.u32 %v617, 4294901760
        %670 = vmatprep.subr.mxu0 %v669
        %v671 = vand.u32 %v616, 4294901760
        %672 = vmatpush1.msra.mxu0 %v671
        %v673 = vand.u32 %v621, 4294901760
        %674 = vmatprep.subr.mxu0 %v673
        %v675 = vand.u32 %v620, 4294901760
        %676 = vmatpush1.msra.mxu0 %v675
        %v677 = vand.u32 %v625, 4294901760
        %678 = vmatprep.subr.mxu0 %v677
        %v679 = vand.u32 %v624, 4294901760
        %680 = vmatpush1.msra.mxu0 %v679
        %v681 = vand.u32 %v629, 4294901760
        %682 = vmatprep.subr.mxu0 %v681
        %v683 = vand.u32 %v628, 4294901760
        %684 = vmatpush1.msra.mxu0 %v683
        %v685 = vand.u32 %v633, 4294901760
        %686 = vmatprep.subr.mxu0 %v685
        %v687 = vand.u32 %v632, 4294901760
        %688 = vmatpush1.msra.mxu0 %v687
        %v689 = vand.u32 %v637, 4294901760
        %690 = vmatprep.subr.mxu0 %v689
        %v691 = vand.u32 %v636, 4294901760
        %692 = vmatpush1.msra.mxu0 %v691
        %v693 = vand.u32 %v641, 4294901760
        %694 = vmatprep.subr.mxu0 %v693
        %v695 = vand.u32 %v640, 4294901760
        %696 = vmatpush1.msra.mxu0 %v695
        %697 = vmatprep.subr.mxu0 0.0
        %698 = vmatpush1.msra.mxu0 0.0
        %699 = vmatprep.subr.mxu0 0.0
        %700 = vmatpush1.msra.mxu0 0.0
        %701 = vmatprep.subr.mxu0 0.0
        %702 = vmatpush1.msra.mxu0 0.0
        %703 = vmatprep.subr.mxu0 0.0
        %704 = vmatpush1.msra.mxu0 0.0
        %705 = vmatprep.subr.mxu0 0.0
        %706 = vmatpush1.msra.mxu0 0.0
        %707 = vmatprep.subr.mxu0 0.0
        %708 = vmatpush1.msra.mxu0 0.0
        %709 = vmatprep.subr.mxu0 0.0
        %710 = vmatpush1.msra.mxu0 0.0
        %711 = vmatprep.subr.mxu0 0.0
        %712 = vmatpush1.msra.mxu0 0.0
        %713 = vmatprep.subr.mxu0 0.0
        %714 = vmatpush1.msra.mxu0 0.0
        %715 = vmatprep.subr.mxu0 0.0
        %716 = vmatpush1.msra.mxu0 0.0
        %717 = vmatprep.subr.mxu0 0.0
        %718 = vmatpush1.msra.mxu0 0.0
        %719 = vmatprep.subr.mxu0 0.0
        %720 = vmatpush1.msra.mxu0 0.0
        %721 = vmatprep.subr.mxu0 0.0
        %722 = vmatpush1.msra.mxu0 0.0
        %723 = vmatprep.subr.mxu0 0.0
        %724 = vmatpush1.msra.mxu0 0.0
        %725 = vmatprep.subr.mxu0 0.0
        %726 = vmatpush1.msra.mxu0 0.0
        %727 = vmatprep.subr.mxu0 0.0
        %728 = vmatpush1.msra.mxu0 0.0
        %729 = vmatprep.subr.mxu0 0.0
        %730 = vmatpush1.msra.mxu0 0.0
        %731 = vmatprep.subr.mxu0 0.0
        %732 = vmatpush1.msra.mxu0 0.0
        %733 = vmatprep.subr.mxu0 0.0
        %734 = vmatpush1.msra.mxu0 0.0
        %735 = vmatprep.subr.mxu0 0.0
        %736 = vmatpush1.msra.mxu0 0.0
        %737 = vmatprep.subr.mxu0 0.0
        %738 = vmatpush1.msra.mxu0 0.0
        %739 = vmatprep.subr.mxu0 0.0
        %740 = vmatpush1.msra.mxu0 0.0
        %741 = vmatprep.subr.mxu0 0.0
        %742 = vmatpush1.msra.mxu0 0.0
        %743 = vmatprep.subr.mxu0 0.0
        %744 = vmatpush1.msra.mxu0 0.0
        %745 = vmatprep.mubr.f32.mxu0 0.0
        %v746 = vand.u32 %v660, 4294901760
        %v747 = vsub.f32 %v660, %v746
        %v748 = vand.u32 %v747, 4294901760
        %v749 = vsub.f32 %v747, %v748
        %v750 = vand.u32 %v749, 4294901760
        %751 = vmatmul.mubr.f32.gmra.mrb[0].mxu0 %v750
        %v752 = vpop.f32.mrb[0].mxu0
        %v753 = vadd.f32 %v651, %v752
        %v754 = vpop.f32.mrb[0].mxu0
        %v755 = vadd.f32 %v651, %v754
        %756 = vmatprep.mubr.f32.mxu0 0.0
        %v757 = vand.u32 %v663, 4294901760
        %v758 = vsub.f32 %v663, %v757
        %v759 = vand.u32 %v758, 4294901760
        %v760 = vsub.f32 %v758, %v759
        %v761 = vand.u32 %v760, 4294901760
        %762 = vmatmul.mubr.f32.gmra.mrb[0].mxu0 %v761
        %v763 = vpop.f32.mrb[0].mxu0
        %v764 = vadd.f32 %v656, %v763
        %v765 = vpop.f32.mrb[0].mxu0
        %v766 = vadd.f32 %v656, %v765
        %767 = vdwg.mxu0
        %v768 = vand.u32 %v613, 4294901760
        %v769 = vsub.f32 %v613, %v768
        %v770 = vand.u32 %v769, 4294901760
        %v771 = vsub.f32 %v769, %v770
        %v772 = vand.u32 %v771, 4294901760
        %773 = vmatprep.subr.mxu0 %v772
        %v774 = vand.u32 %v612, 4294901760
        %v775 = vsub.f32 %v612, %v774
        %v776 = vand.u32 %v775, 4294901760
        %v777 = vsub.f32 %v775, %v776
        %v778 = vand.u32 %v777, 4294901760
        %779 = vmatpush1.msra.mxu0 %v778
        %v780 = vand.u32 %v617, 4294901760
        %v781 = vsub.f32 %v617, %v780
        %v782 = vand.u32 %v781, 4294901760
        %v783 = vsub.f32 %v781, %v782
        %v784 = vand.u32 %v783, 4294901760
        %785 = vmatprep.subr.mxu0 %v784
        %v786 = vand.u32 %v616, 4294901760
        %v787 = vsub.f32 %v616, %v786
        %v788 = vand.u32 %v787, 4294901760
        %v789 = vsub.f32 %v787, %v788
        %v790 = vand.u32 %v789, 4294901760
        %791 = vmatpush1.msra.mxu0 %v790
        %v792 = vand.u32 %v621, 4294901760
        %v793 = vsub.f32 %v621, %v792
        %v794 = vand.u32 %v793, 4294901760
        %v795 = vsub.f32 %v793, %v794
        %v796 = vand.u32 %v795, 4294901760
        %797 = vmatprep.subr.mxu0 %v796
        %v798 = vand.u32 %v620, 4294901760
        %v799 = vsub.f32 %v620, %v798
        %v800 = vand.u32 %v799, 4294901760
        %v801 = vsub.f32 %v799, %v800
        %v802 = vand.u32 %v801, 4294901760
        %803 = vmatpush1.msra.mxu0 %v802
        %v804 = vand.u32 %v625, 4294901760
        %v805 = vsub.f32 %v625, %v804
        %v806 = vand.u32 %v805, 4294901760
        %v807 = vsub.f32 %v805, %v806
        %v808 = vand.u32 %v807, 4294901760
        %809 = vmatprep.subr.mxu0 %v808
        %v810 = vand.u32 %v624, 4294901760
        %v811 = vsub.f32 %v624, %v810
        %v812 = vand.u32 %v811, 4294901760
        %v813 = vsub.f32 %v811, %v812
        %v814 = vand.u32 %v813, 4294901760
        %815 = vmatpush1.msra.mxu0 %v814
        %v816 = vand.u32 %v629, 4294901760
        %v817 = vsub.f32 %v629, %v816
        %v818 = vand.u32 %v817, 4294901760
        %v819 = vsub.f32 %v817, %v818
        %v820 = vand.u32 %v819, 4294901760
        %821 = vmatprep.subr.mxu0 %v820
        %v822 = vand.u32 %v628, 4294901760
        %v823 = vsub.f32 %v628, %v822
        %v824 = vand.u32 %v823, 4294901760
        %v825 = vsub.f32 %v823, %v824
        %v826 = vand.u32 %v825, 4294901760
        %827 = vmatpush1.msra.mxu0 %v826
        %v828 = vand.u32 %v633, 4294901760
        %v829 = vsub.f32 %v633, %v828
        %v830 = vand.u32 %v829, 4294901760
        %v831 = vsub.f32 %v829, %v830
        %v832 = vand.u32 %v831, 4294901760
        %833 = vmatprep.subr.mxu0 %v832
        %v834 = vand.u32 %v632, 4294901760
        %v835 = vsub.f32 %v632, %v834
        %v836 = vand.u32 %v835, 4294901760
        %v837 = vsub.f32 %v835, %v836
        %v838 = vand.u32 %v837, 4294901760
        %839 = vmatpush1.msra.mxu0 %v838
        %v840 = vand.u32 %v637, 4294901760
        %v841 = vsub.f32 %v637, %v840
        %v842 = vand.u32 %v841, 4294901760
        %v843 = vsub.f32 %v841, %v842
        %v844 = vand.u32 %v843, 4294901760
        %845 = vmatprep.subr.mxu0 %v844
        %v846 = vand.u32 %v636, 4294901760
        %v847 = vsub.f32 %v636, %v846
        %v848 = vand.u32 %v847, 4294901760
        %v849 = vsub.f32 %v847, %v848
        %v850 = vand.u32 %v849, 4294901760
        %851 = vmatpush1.msra.mxu0 %v850
        %v852 = vand.u32 %v641, 4294901760
        %v853 = vsub.f32 %v641, %v852
        %v854 = vand.u32 %v853, 4294901760
        %v855 = vsub.f32 %v853, %v854
        %v856 = vand.u32 %v855, 4294901760
        %857 = vmatprep.subr.mxu0 %v856
        %v858 = vand.u32 %v640, 4294901760
        %v859 = vsub.f32 %v640, %v858
        %v860 = vand.u32 %v859, 4294901760
        %v861 = vsub.f32 %v859, %v860
        %v862 = vand.u32 %v861, 4294901760
        %863 = vmatpush1.msra.mxu0 %v862
        %864 = vmatprep.subr.mxu0 0.0
        %865 = vmatpush1.msra.mxu0 0.0
        %866 = vmatprep.subr.mxu0 0.0
        %867 = vmatpush1.msra.mxu0 0.0
        %868 = vmatprep.subr.mxu0 0.0
        %869 = vmatpush1.msra.mxu0 0.0
        %870 = vmatprep.subr.mxu0 0.0
        %871 = vmatpush1.msra.mxu0 0.0
        %872 = vmatprep.subr.mxu0 0.0
        %873 = vmatpush1.msra.mxu0 0.0
        %874 = vmatprep.subr.mxu0 0.0
        %875 = vmatpush1.msra.mxu0 0.0
        %876 = vmatprep.subr.mxu0 0.0
        %877 = vmatpush1.msra.mxu0 0.0
        %878 = vmatprep.subr.mxu0 0.0
        %879 = vmatpush1.msra.mxu0 0.0
        %880 = vmatprep.subr.mxu0 0.0
        %881 = vmatpush1.msra.mxu0 0.0
        %882 = vmatprep.subr.mxu0 0.0
        %883 = vmatpush1.msra.mxu0 0.0
        %884 = vmatprep.subr.mxu0 0.0
        %885 = vmatpush1.msra.mxu0 0.0
        %886 = vmatprep.subr.mxu0 0.0
        %887 = vmatpush1.msra.mxu0 0.0
        %888 = vmatprep.subr.mxu0 0.0
        %889 = vmatpush1.msra.mxu0 0.0
        %890 = vmatprep.subr.mxu0 0.0
        %891 = vmatpush1.msra.mxu0 0.0
        %892 = vmatprep.subr.mxu0 0.0
        %893 = vmatpush1.msra.mxu0 0.0
        %894 = vmatprep.subr.mxu0 0.0
        %895 = vmatpush1.msra.mxu0 0.0
        %896 = vmatprep.subr.mxu0 0.0
        %897 = vmatpush1.msra.mxu0 0.0
        %898 = vmatprep.subr.mxu0 0.0
        %899 = vmatpush1.msra.mxu0 0.0
        %900 = vmatprep.subr.mxu0 0.0
        %901 = vmatpush1.msra.mxu0 0.0
        %902 = vmatprep.subr.mxu0 0.0
        %903 = vmatpush1.msra.mxu0 0.0
        %904 = vmatprep.subr.mxu0 0.0
        %905 = vmatpush1.msra.mxu0 0.0
        %906 = vmatprep.subr.mxu0 0.0
        %907 = vmatpush1.msra.mxu0 0.0
        %908 = vmatprep.subr.mxu0 0.0
        %909 = vmatpush1.msra.mxu0 0.0
        %910 = vmatprep.subr.mxu0 0.0
        %911 = vmatpush1.msra.mxu0 0.0
        %912 = vmatprep.mubr.f32.mxu0 0.0
        %v913 = vand.u32 %v660, 4294901760
        %914 = vmatmul.mubr.f32.gmra.mrb[0].mxu0 %v913
        %v915 = vpop.f32.mrb[0].mxu0
        %v916 = vadd.f32 %v753, %v915
        %v917 = vpop.f32.mrb[0].mxu0
        %v918 = vadd.f32 %v755, %v917
        %919 = vmatprep.mubr.f32.mxu0 0.0
        %v920 = vand.u32 %v663, 4294901760
        %921 = vmatmul.mubr.f32.gmra.mrb[0].mxu0 %v920
        %v922 = vpop.f32.mrb[0].mxu0
        %v923 = vadd.f32 %v764, %v922
        %v924 = vpop.f32.mrb[0].mxu0
        %v925 = vadd.f32 %v766, %v924
        %926 = vdwg.mxu0
        %v927 = vand.u32 %v613, 4294901760
        %v928 = vsub.f32 %v613, %v927
        %929 = vmatprep.subr.mxu0 %v928
        %v930 = vand.u32 %v612, 4294901760
        %v931 = vsub.f32 %v612, %v930
        %932 = vmatpush1.msra.mxu0 %v931
        %v933 = vand.u32 %v617, 4294901760
        %v934 = vsub.f32 %v617, %v933
        %935 = vmatprep.subr.mxu0 %v934
        %v936 = vand.u32 %v616, 4294901760
        %v937 = vsub.f32 %v616, %v936
        %938 = vmatpush1.msra.mxu0 %v937
        %v939 = vand.u32 %v621, 4294901760
        %v940 = vsub.f32 %v621, %v939
        %941 = vmatprep.subr.mxu0 %v940
        %v942 = vand.u32 %v620, 4294901760
        %v943 = vsub.f32 %v620, %v942
        %944 = vmatpush1.msra.mxu0 %v943
        %v945 = vand.u32 %v625, 4294901760
        %v946 = vsub.f32 %v625, %v945
        %947 = vmatprep.subr.mxu0 %v946
        %v948 = vand.u32 %v624, 4294901760
        %v949 = vsub.f32 %v624, %v948
        %950 = vmatpush1.msra.mxu0 %v949
        %v951 = vand.u32 %v629, 4294901760
        %v952 = vsub.f32 %v629, %v951
        %953 = vmatprep.subr.mxu0 %v952
        %v954 = vand.u32 %v628, 4294901760
        %v955 = vsub.f32 %v628, %v954
        %956 = vmatpush1.msra.mxu0 %v955
        %v957 = vand.u32 %v633, 4294901760
        %v958 = vsub.f32 %v633, %v957
        %959 = vmatprep.subr.mxu0 %v958
        %v960 = vand.u32 %v632, 4294901760
        %v961 = vsub.f32 %v632, %v960
        %962 = vmatpush1.msra.mxu0 %v961
        %v963 = vand.u32 %v637, 4294901760
        %v964 = vsub.f32 %v637, %v963
        %965 = vmatprep.subr.mxu0 %v964
        %v966 = vand.u32 %v636, 4294901760
        %v967 = vsub.f32 %v636, %v966
        %968 = vmatpush1.msra.mxu0 %v967
        %v969 = vand.u32 %v641, 4294901760
        %v970 = vsub.f32 %v641, %v969
        %971 = vmatprep.subr.mxu0 %v970
        %v972 = vand.u32 %v640, 4294901760
        %v973 = vsub.f32 %v640, %v972
        %974 = vmatpush1.msra.mxu0 %v973
        %975 = vmatprep.subr.mxu0 0.0
        %976 = vmatpush1.msra.mxu0 0.0
        %977 = vmatprep.subr.mxu0 0.0
        %978 = vmatpush1.msra.mxu0 0.0
        %979 = vmatprep.subr.mxu0 0.0
        %980 = vmatpush1.msra.mxu0 0.0
        %981 = vmatprep.subr.mxu0 0.0
        %982 = vmatpush1.msra.mxu0 0.0
        %983 = vmatprep.subr.mxu0 0.0
        %984 = vmatpush1.msra.mxu0 0.0
        %985 = vmatprep.subr.mxu0 0.0
        %986 = vmatpush1.msra.mxu0 0.0
        %987 = vmatprep.subr.mxu0 0.0
        %988 = vmatpush1.msra.mxu0 0.0
        %989 = vmatprep.subr.mxu0 0.0
        %990 = vmatpush1.msra.mxu0 0.0
        %991 = vmatprep.subr.mxu0 0.0
        %992 = vmatpush1.msra.mxu0 0.0
        %993 = vmatprep.subr.mxu0 0.0
        %994 = vmatpush1.msra.mxu0 0.0
        %995 = vmatprep.subr.mxu0 0.0
        %996 = vmatpush1.msra.mxu0 0.0
        %997 = vmatprep.subr.mxu0 0.0
        %998 = vmatpush1.msra.mxu0 0.0
        %999 = vmatprep.subr.mxu0 0.0
        %1000 = vmatpush1.msra.mxu0 0.0
        %1001 = vmatprep.subr.mxu0 0.0
        %1002 = vmatpush1.msra.mxu0 0.0
        %1003 = vmatprep.subr.mxu0 0.0
        %1004 = vmatpush1.msra.mxu0 0.0
        %1005 = vmatprep.subr.mxu0 0.0
        %1006 = vmatpush1.msra.mxu0 0.0
        %1007 = vmatprep.subr.mxu0 0.0
        %1008 = vmatpush1.msra.mxu0 0.0
        %1009 = vmatprep.subr.mxu0 0.0
        %1010 = vmatpush1.msra.mxu0 0.0
        %1011 = vmatprep.subr.mxu0 0.0
        %1012 = vmatpush1.msra.mxu0 0.0
        %1013 = vmatprep.subr.mxu0 0.0
        %1014 = vmatpush1.msra.mxu0 0.0
        %1015 = vmatprep.subr.mxu0 0.0
        %1016 = vmatpush1.msra.mxu0 0.0
        %1017 = vmatprep.subr.mxu0 0.0
        %1018 = vmatpush1.msra.mxu0 0.0
        %1019 = vmatprep.subr.mxu0 0.0
        %1020 = vmatpush1.msra.mxu0 0.0
        %1021 = vmatprep.subr.mxu0 0.0
        %1022 = vmatpush1.msra.mxu0 0.0
        %1023 = vmatprep.mubr.f32.mxu0 0.0
        %v1024 = vand.u32 %v660, 4294901760
        %v1025 = vsub.f32 %v660, %v1024
        %1026 = vmatmul.mubr.f32.gmra.mrb[0].mxu0 %v1025
        %v1027 = vpop.f32.mrb[0].mxu0
        %v1028 = vadd.f32 %v916, %v1027
        %v1029 = vpop.f32.mrb[0].mxu0
        %v1030 = vadd.f32 %v918, %v1029
        %1031 = vmatprep.mubr.f32.mxu0 0.0
        %v1032 = vand.u32 %v663, 4294901760
        %v1033 = vsub.f32 %v663, %v1032
        %1034 = vmatmul.mubr.f32.gmra.mrb[0].mxu0 %v1033
        %v1035 = vpop.f32.mrb[0].mxu0
        %v1036 = vadd.f32 %v923, %v1035
        %v1037 = vpop.f32.mrb[0].mxu0
        %v1038 = vadd.f32 %v925, %v1037
        %1039 = vdwg.mxu0
        %v1040 = vand.u32 %v613, 4294901760
        %1041 = vmatprep.subr.mxu0 %v1040
        %v1042 = vand.u32 %v612, 4294901760
        %1043 = vmatpush1.msra.mxu0 %v1042
        %v1044 = vand.u32 %v617, 4294901760
        %1045 = vmatprep.subr.mxu0 %v1044
        %v1046 = vand.u32 %v616, 4294901760
        %1047 = vmatpush1.msra.mxu0 %v1046
        %v1048 = vand.u32 %v621, 4294901760
        %1049 = vmatprep.subr.mxu0 %v1048
        %v1050 = vand.u32 %v620, 4294901760
        %1051 = vmatpush1.msra.mxu0 %v1050
        %v1052 = vand.u32 %v625, 4294901760
        %1053 = vmatprep.subr.mxu0 %v1052
        %v1054 = vand.u32 %v624, 4294901760
        %1055 = vmatpush1.msra.mxu0 %v1054
        %v1056 = vand.u32 %v629, 4294901760
        %1057 = vmatprep.subr.mxu0 %v1056
        %v1058 = vand.u32 %v628, 4294901760
        %1059 = vmatpush1.msra.mxu0 %v1058
        %v1060 = vand.u32 %v633, 4294901760
        %1061 = vmatprep.subr.mxu0 %v1060
        %v1062 = vand.u32 %v632, 4294901760
        %1063 = vmatpush1.msra.mxu0 %v1062
        %v1064 = vand.u32 %v637, 4294901760
        %1065 = vmatprep.subr.mxu0 %v1064
        %v1066 = vand.u32 %v636, 4294901760
        %1067 = vmatpush1.msra.mxu0 %v1066
        %v1068 = vand.u32 %v641, 4294901760
        %1069 = vmatprep.subr.mxu0 %v1068
        %v1070 = vand.u32 %v640, 4294901760
        %1071 = vmatpush1.msra.mxu0 %v1070
        %1072 = vmatprep.subr.mxu0 0.0
        %1073 = vmatpush1.msra.mxu0 0.0
        %1074 = vmatprep.subr.mxu0 0.0
        %1075 = vmatpush1.msra.mxu0 0.0
        %1076 = vmatprep.subr.mxu0 0.0
        %1077 = vmatpush1.msra.mxu0 0.0
        %1078 = vmatprep.subr.mxu0 0.0
        %1079 = vmatpush1.msra.mxu0 0.0
        %1080 = vmatprep.subr.mxu0 0.0
        %1081 = vmatpush1.msra.mxu0 0.0
        %1082 = vmatprep.subr.mxu0 0.0
        %1083 = vmatpush1.msra.mxu0 0.0
        %1084 = vmatprep.subr.mxu0 0.0
        %1085 = vmatpush1.msra.mxu0 0.0
        %1086 = vmatprep.subr.mxu0 0.0
        %1087 = vmatpush1.msra.mxu0 0.0
        %1088 = vmatprep.subr.mxu0 0.0
        %1089 = vmatpush1.msra.mxu0 0.0
        %1090 = vmatprep.subr.mxu0 0.0
        %1091 = vmatpush1.msra.mxu0 0.0
        %1092 = vmatprep.subr.mxu0 0.0
        %1093 = vmatpush1.msra.mxu0 0.0
        %1094 = vmatprep.subr.mxu0 0.0
        %1095 = vmatpush1.msra.mxu0 0.0
        %1096 = vmatprep.subr.mxu0 0.0
        %1097 = vmatpush1.msra.mxu0 0.0
        %1098 = vmatprep.subr.mxu0 0.0
        %1099 = vmatpush1.msra.mxu0 0.0
        %1100 = vmatprep.subr.mxu0 0.0
        %1101 = vmatpush1.msra.mxu0 0.0
        %1102 = vmatprep.subr.mxu0 0.0
        %1103 = vmatpush1.msra.mxu0 0.0
        %1104 = vmatprep.subr.mxu0 0.0
        %1105 = vmatpush1.msra.mxu0 0.0
        %1106 = vmatprep.subr.mxu0 0.0
        %1107 = vmatpush1.msra.mxu0 0.0
        %1108 = vmatprep.subr.mxu0 0.0
        %1109 = vmatpush1.msra.mxu0 0.0
        %1110 = vmatprep.subr.mxu0 0.0
        %1111 = vmatpush1.msra.mxu0 0.0
        %1112 = vmatprep.subr.mxu0 0.0
        %1113 = vmatpush1.msra.mxu0 0.0
        %1114 = vmatprep.subr.mxu0 0.0
        %1115 = vmatpush1.msra.mxu0 0.0
        %1116 = vmatprep.subr.mxu0 0.0
        %1117 = vmatpush1.msra.mxu0 0.0
        %1118 = vmatprep.subr.mxu0 0.0
        %1119 = vmatpush1.msra.mxu0 0.0
        %1120 = vmatprep.mubr.f32.mxu0 0.0
        %v1121 = vand.u32 %v660, 4294901760
        %v1122 = vsub.f32 %v660, %v1121
        %v1123 = vand.u32 %v1122, 4294901760
        %1124 = vmatmul.mubr.f32.gmra.mrb[0].mxu0 %v1123
        %v1125 = vpop.f32.mrb[0].mxu0
        %v1126 = vadd.f32 %v1028, %v1125
        %v1127 = vpop.f32.mrb[0].mxu0
        %v1128 = vadd.f32 %v1030, %v1127
        %1129 = vmatprep.mubr.f32.mxu0 0.0
        %v1130 = vand.u32 %v663, 4294901760
        %v1131 = vsub.f32 %v663, %v1130
        %v1132 = vand.u32 %v1131, 4294901760
        %1133 = vmatmul.mubr.f32.gmra.mrb[0].mxu0 %v1132
        %v1134 = vpop.f32.mrb[0].mxu0
        %v1135 = vadd.f32 %v1036, %v1134
        %v1136 = vpop.f32.mrb[0].mxu0
        %v1137 = vadd.f32 %v1038, %v1136
        %1138 = vdwg.mxu0
        %v1139 = vand.u32 %v613, 4294901760
        %v1140 = vsub.f32 %v613, %v1139
        %v1141 = vand.u32 %v1140, 4294901760
        %1142 = vmatprep.subr.mxu0 %v1141
        %v1143 = vand.u32 %v612, 4294901760
        %v1144 = vsub.f32 %v612, %v1143
        %v1145 = vand.u32 %v1144, 4294901760
        %1146 = vmatpush1.msra.mxu0 %v1145
        %v1147 = vand.u32 %v617, 4294901760
        %v1148 = vsub.f32 %v617, %v1147
        %v1149 = vand.u32 %v1148, 4294901760
        %1150 = vmatprep.subr.mxu0 %v1149
        %v1151 = vand.u32 %v616, 4294901760
        %v1152 = vsub.f32 %v616, %v1151
        %v1153 = vand.u32 %v1152, 4294901760
        %1154 = vmatpush1.msra.mxu0 %v1153
        %v1155 = vand.u32 %v621, 4294901760
        %v1156 = vsub.f32 %v621, %v1155
        %v1157 = vand.u32 %v1156, 4294901760
        %1158 = vmatprep.subr.mxu0 %v1157
        %v1159 = vand.u32 %v620, 4294901760
        %v1160 = vsub.f32 %v620, %v1159
        %v1161 = vand.u32 %v1160, 4294901760
        %1162 = vmatpush1.msra.mxu0 %v1161
        %v1163 = vand.u32 %v625, 4294901760
        %v1164 = vsub.f32 %v625, %v1163
        %v1165 = vand.u32 %v1164, 4294901760
        %1166 = vmatprep.subr.mxu0 %v1165
        %v1167 = vand.u32 %v624, 4294901760
        %v1168 = vsub.f32 %v624, %v1167
        %v1169 = vand.u32 %v1168, 4294901760
        %1170 = vmatpush1.msra.mxu0 %v1169
        %v1171 = vand.u32 %v629, 4294901760
        %v1172 = vsub.f32 %v629, %v1171
        %v1173 = vand.u32 %v1172, 4294901760
        %1174 = vmatprep.subr.mxu0 %v1173
        %v1175 = vand.u32 %v628, 4294901760
        %v1176 = vsub.f32 %v628, %v1175
        %v1177 = vand.u32 %v1176, 4294901760
        %1178 = vmatpush1.msra.mxu0 %v1177
        %v1179 = vand.u32 %v633, 4294901760
        %v1180 = vsub.f32 %v633, %v1179
        %v1181 = vand.u32 %v1180, 4294901760
        %1182 = vmatprep.subr.mxu0 %v1181
        %v1183 = vand.u32 %v632, 4294901760
        %v1184 = vsub.f32 %v632, %v1183
        %v1185 = vand.u32 %v1184, 4294901760
        %1186 = vmatpush1.msra.mxu0 %v1185
        %v1187 = vand.u32 %v637, 4294901760
        %v1188 = vsub.f32 %v637, %v1187
        %v1189 = vand.u32 %v1188, 4294901760
        %1190 = vmatprep.subr.mxu0 %v1189
        %v1191 = vand.u32 %v636, 4294901760
        %v1192 = vsub.f32 %v636, %v1191
        %v1193 = vand.u32 %v1192, 4294901760
        %1194 = vmatpush1.msra.mxu0 %v1193
        %v1195 = vand.u32 %v641, 4294901760
        %v1196 = vsub.f32 %v641, %v1195
        %v1197 = vand.u32 %v1196, 4294901760
        %1198 = vmatprep.subr.mxu0 %v1197
        %v1199 = vand.u32 %v640, 4294901760
        %v1200 = vsub.f32 %v640, %v1199
        %v1201 = vand.u32 %v1200, 4294901760
        %1202 = vmatpush1.msra.mxu0 %v1201
        %1203 = vmatprep.subr.mxu0 0.0
        %1204 = vmatpush1.msra.mxu0 0.0
        %1205 = vmatprep.subr.mxu0 0.0
        %1206 = vmatpush1.msra.mxu0 0.0
        %1207 = vmatprep.subr.mxu0 0.0
        %1208 = vmatpush1.msra.mxu0 0.0
        %1209 = vmatprep.subr.mxu0 0.0
        %1210 = vmatpush1.msra.mxu0 0.0
        %1211 = vmatprep.subr.mxu0 0.0
        %1212 = vmatpush1.msra.mxu0 0.0
        %1213 = vmatprep.subr.mxu0 0.0
        %1214 = vmatpush1.msra.mxu0 0.0
        %1215 = vmatprep.subr.mxu0 0.0
        %1216 = vmatpush1.msra.mxu0 0.0
        %1217 = vmatprep.subr.mxu0 0.0
        %1218 = vmatpush1.msra.mxu0 0.0
        %1219 = vmatprep.subr.mxu0 0.0
        %1220 = vmatpush1.msra.mxu0 0.0
        %1221 = vmatprep.subr.mxu0 0.0
        %1222 = vmatpush1.msra.mxu0 0.0
        %1223 = vmatprep.subr.mxu0 0.0
        %1224 = vmatpush1.msra.mxu0 0.0
        %1225 = vmatprep.subr.mxu0 0.0
        %1226 = vmatpush1.msra.mxu0 0.0
        %1227 = vmatprep.subr.mxu0 0.0
        %1228 = vmatpush1.msra.mxu0 0.0
        %1229 = vmatprep.subr.mxu0 0.0
        %1230 = vmatpush1.msra.mxu0 0.0
        %1231 = vmatprep.subr.mxu0 0.0
        %1232 = vmatpush1.msra.mxu0 0.0
        %1233 = vmatprep.subr.mxu0 0.0
        %1234 = vmatpush1.msra.mxu0 0.0
        %1235 = vmatprep.subr.mxu0 0.0
        %1236 = vmatpush1.msra.mxu0 0.0
        %1237 = vmatprep.subr.mxu0 0.0
        %1238 = vmatpush1.msra.mxu0 0.0
        %1239 = vmatprep.subr.mxu0 0.0
        %1240 = vmatpush1.msra.mxu0 0.0
        %1241 = vmatprep.subr.mxu0 0.0
        %1242 = vmatpush1.msra.mxu0 0.0
        %1243 = vmatprep.subr.mxu0 0.0
        %1244 = vmatpush1.msra.mxu0 0.0
        %1245 = vmatprep.subr.mxu0 0.0
        %1246 = vmatpush1.msra.mxu0 0.0
        %1247 = vmatprep.subr.mxu0 0.0
        %1248 = vmatpush1.msra.mxu0 0.0
        %1249 = vmatprep.subr.mxu0 0.0
        %1250 = vmatpush1.msra.mxu0 0.0
        %1251 = vmatprep.mubr.f32.mxu0 0.0
        %v1252 = vand.u32 %v660, 4294901760
        %1253 = vmatmul.mubr.f32.gmra.mrb[0].mxu0 %v1252
        %v1254 = vpop.f32.mrb[0].mxu0
        %v1255 = vadd.f32 %v1126, %v1254
        %v1256 = vpop.f32.mrb[0].mxu0
        %v1257 = vadd.f32 %v1128, %v1256
        %1258 = vmatprep.mubr.f32.mxu0 0.0
        %v1259 = vand.u32 %v663, 4294901760
        %1260 = vmatmul.mubr.f32.gmra.mrb[0].mxu0 %v1259
        %v1261 = vpop.f32.mrb[0].mxu0
        %v1262 = vadd.f32 %v1135, %v1261
        %v1263 = vpop.f32.mrb[0].mxu0
        %v1264 = vadd.f32 %v1137, %v1263
        %1265 = vdwg.mxu0
        %v1266 = vand.u32 %v613, 4294901760
        %1267 = vmatprep.subr.mxu0 %v1266
        %v1268 = vand.u32 %v612, 4294901760
        %1269 = vmatpush1.msra.mxu0 %v1268
        %v1270 = vand.u32 %v617, 4294901760
        %1271 = vmatprep.subr.mxu0 %v1270
        %v1272 = vand.u32 %v616, 4294901760
        %1273 = vmatpush1.msra.mxu0 %v1272
        %v1274 = vand.u32 %v621, 4294901760
        %1275 = vmatprep.subr.mxu0 %v1274
        %v1276 = vand.u32 %v620, 4294901760
        %1277 = vmatpush1.msra.mxu0 %v1276
        %v1278 = vand.u32 %v625, 4294901760
        %1279 = vmatprep.subr.mxu0 %v1278
        %v1280 = vand.u32 %v624, 4294901760
        %1281 = vmatpush1.msra.mxu0 %v1280
        %v1282 = vand.u32 %v629, 4294901760
        %1283 = vmatprep.subr.mxu0 %v1282
        %v1284 = vand.u32 %v628, 4294901760
        %1285 = vmatpush1.msra.mxu0 %v1284
        %v1286 = vand.u32 %v633, 4294901760
        %1287 = vmatprep.subr.mxu0 %v1286
        %v1288 = vand.u32 %v632, 4294901760
        %1289 = vmatpush1.msra.mxu0 %v1288
        %v1290 = vand.u32 %v637, 4294901760
        %1291 = vmatprep.subr.mxu0 %v1290
        %v1292 = vand.u32 %v636, 4294901760
        %1293 = vmatpush1.msra.mxu0 %v1292
        %v1294 = vand.u32 %v641, 4294901760
        %1295 = vmatprep.subr.mxu0 %v1294
        %v1296 = vand.u32 %v640, 4294901760
        %1297 = vmatpush1.msra.mxu0 %v1296
        %1298 = vmatprep.subr.mxu0 0.0
        %1299 = vmatpush1.msra.mxu0 0.0
        %1300 = vmatprep.subr.mxu0 0.0
        %1301 = vmatpush1.msra.mxu0 0.0
        %1302 = vmatprep.subr.mxu0 0.0
        %1303 = vmatpush1.msra.mxu0 0.0
        %1304 = vmatprep.subr.mxu0 0.0
        %1305 = vmatpush1.msra.mxu0 0.0
        %1306 = vmatprep.subr.mxu0 0.0
        %1307 = vmatpush1.msra.mxu0 0.0
        %1308 = vmatprep.subr.mxu0 0.0
        %1309 = vmatpush1.msra.mxu0 0.0
        %1310 = vmatprep.subr.mxu0 0.0
        %1311 = vmatpush1.msra.mxu0 0.0
        %1312 = vmatprep.subr.mxu0 0.0
        %1313 = vmatpush1.msra.mxu0 0.0
        %1314 = vmatprep.subr.mxu0 0.0
        %1315 = vmatpush1.msra.mxu0 0.0
        %1316 = vmatprep.subr.mxu0 0.0
        %1317 = vmatpush1.msra.mxu0 0.0
        %1318 = vmatprep.subr.mxu0 0.0
        %1319 = vmatpush1.msra.mxu0 0.0
        %1320 = vmatprep.subr.mxu0 0.0
        %1321 = vmatpush1.msra.mxu0 0.0
        %1322 = vmatprep.subr.mxu0 0.0
        %1323 = vmatpush1.msra.mxu0 0.0
        %1324 = vmatprep.subr.mxu0 0.0
        %1325 = vmatpush1.msra.mxu0 0.0
        %1326 = vmatprep.subr.mxu0 0.0
        %1327 = vmatpush1.msra.mxu0 0.0
        %1328 = vmatprep.subr.mxu0 0.0
        %1329 = vmatpush1.msra.mxu0 0.0
        %1330 = vmatprep.subr.mxu0 0.0
        %1331 = vmatpush1.msra.mxu0 0.0
        %1332 = vmatprep.subr.mxu0 0.0
        %1333 = vmatpush1.msra.mxu0 0.0
        %1334 = vmatprep.subr.mxu0 0.0
        %1335 = vmatpush1.msra.mxu0 0.0
        %1336 = vmatprep.subr.mxu0 0.0
        %1337 = vmatpush1.msra.mxu0 0.0
        %1338 = vmatprep.subr.mxu0 0.0
        %1339 = vmatpush1.msra.mxu0 0.0
        %1340 = vmatprep.subr.mxu0 0.0
        %1341 = vmatpush1.msra.mxu0 0.0
        %1342 = vmatprep.subr.mxu0 0.0
        %1343 = vmatpush1.msra.mxu0 0.0
        %1344 = vmatprep.subr.mxu0 0.0
        %1345 = vmatpush1.msra.mxu0 0.0
        %1346 = vmatprep.mubr.f32.mxu0 0.0
        %v1347 = vand.u32 %v660, 4294901760
        %1348 = vmatmul.mubr.f32.gmra.mrb[0].mxu0 %v1347
        %v1349 = vpop.f32.mrb[0].mxu0
        %v1350 = vadd.f32 %v1255, %v1349
        %v1351 = vpop.f32.mrb[0].mxu0
        %v1352 = vadd.f32 %v1257, %v1351
        %1353 = vmatprep.mubr.f32.mxu0 0.0
        %v1354 = vand.u32 %v663, 4294901760
        %1355 = vmatmul.mubr.f32.gmra.mrb[0].mxu0 %v1354
        %v1356 = vpop.f32.mrb[0].mxu0
        %v1357 = vadd.f32 %v1262, %v1356
        %v1358 = vpop.f32.mrb[0].mxu0
        %v1359 = vadd.f32 %v1264, %v1358
        %1360 = vdwg.mxu0
        %v1361 = vand.u32 %v615, 4294901760
        %1362 = vmatprep.subr.mxu0 %v1361
        %v1363 = vand.u32 %v614, 4294901760
        %1364 = vmatpush1.msra.mxu0 %v1363
        %v1365 = vand.u32 %v619, 4294901760
        %1366 = vmatprep.subr.mxu0 %v1365
        %v1367 = vand.u32 %v618, 4294901760
        %1368 = vmatpush1.msra.mxu0 %v1367
        %v1369 = vand.u32 %v623, 4294901760
        %1370 = vmatprep.subr.mxu0 %v1369
        %v1371 = vand.u32 %v622, 4294901760
        %1372 = vmatpush1.msra.mxu0 %v1371
        %v1373 = vand.u32 %v627, 4294901760
        %1374 = vmatprep.subr.mxu0 %v1373
        %v1375 = vand.u32 %v626, 4294901760
        %1376 = vmatpush1.msra.mxu0 %v1375
        %v1377 = vand.u32 %v631, 4294901760
        %1378 = vmatprep.subr.mxu0 %v1377
        %v1379 = vand.u32 %v630, 4294901760
        %1380 = vmatpush1.msra.mxu0 %v1379
        %v1381 = vand.u32 %v635, 4294901760
        %1382 = vmatprep.subr.mxu0 %v1381
        %v1383 = vand.u32 %v634, 4294901760
        %1384 = vmatpush1.msra.mxu0 %v1383
        %v1385 = vand.u32 %v639, 4294901760
        %1386 = vmatprep.subr.mxu0 %v1385
        %v1387 = vand.u32 %v638, 4294901760
        %1388 = vmatpush1.msra.mxu0 %v1387
        %v1389 = vand.u32 %v643, 4294901760
        %1390 = vmatprep.subr.mxu0 %v1389
        %v1391 = vand.u32 %v642, 4294901760
        %1392 = vmatpush1.msra.mxu0 %v1391
        %1393 = vmatprep.subr.mxu0 0.0
        %1394 = vmatpush1.msra.mxu0 0.0
        %1395 = vmatprep.subr.mxu0 0.0
        %1396 = vmatpush1.msra.mxu0 0.0
        %1397 = vmatprep.subr.mxu0 0.0
        %1398 = vmatpush1.msra.mxu0 0.0
        %1399 = vmatprep.subr.mxu0 0.0
        %1400 = vmatpush1.msra.mxu0 0.0
        %1401 = vmatprep.subr.mxu0 0.0
        %1402 = vmatpush1.msra.mxu0 0.0
        %1403 = vmatprep.subr.mxu0 0.0
        %1404 = vmatpush1.msra.mxu0 0.0
        %1405 = vmatprep.subr.mxu0 0.0
        %1406 = vmatpush1.msra.mxu0 0.0
        %1407 = vmatprep.subr.mxu0 0.0
        %1408 = vmatpush1.msra.mxu0 0.0
        %1409 = vmatprep.subr.mxu0 0.0
        %1410 = vmatpush1.msra.mxu0 0.0
        %1411 = vmatprep.subr.mxu0 0.0
        %1412 = vmatpush1.msra.mxu0 0.0
        %1413 = vmatprep.subr.mxu0 0.0
        %1414 = vmatpush1.msra.mxu0 0.0
        %1415 = vmatprep.subr.mxu0 0.0
        %1416 = vmatpush1.msra.mxu0 0.0
        %1417 = vmatprep.subr.mxu0 0.0
        %1418 = vmatpush1.msra.mxu0 0.0
        %1419 = vmatprep.subr.mxu0 0.0
        %1420 = vmatpush1.msra.mxu0 0.0
        %1421 = vmatprep.subr.mxu0 0.0
        %1422 = vmatpush1.msra.mxu0 0.0
        %1423 = vmatprep.subr.mxu0 0.0
        %1424 = vmatpush1.msra.mxu0 0.0
        %1425 = vmatprep.subr.mxu0 0.0
        %1426 = vmatpush1.msra.mxu0 0.0
        %1427 = vmatprep.subr.mxu0 0.0
        %1428 = vmatpush1.msra.mxu0 0.0
        %1429 = vmatprep.subr.mxu0 0.0
        %1430 = vmatpush1.msra.mxu0 0.0
        %1431 = vmatprep.subr.mxu0 0.0
        %1432 = vmatpush1.msra.mxu0 0.0
        %1433 = vmatprep.subr.mxu0 0.0
        %1434 = vmatpush1.msra.mxu0 0.0
        %1435 = vmatprep.subr.mxu0 0.0
        %1436 = vmatpush1.msra.mxu0 0.0
        %1437 = vmatprep.subr.mxu0 0.0
        %1438 = vmatpush1.msra.mxu0 0.0
        %1439 = vmatprep.subr.mxu0 0.0
        %1440 = vmatpush1.msra.mxu0 0.0
        %1441 = vmatprep.mubr.f32.mxu0 0.0
        %v1442 = vand.u32 %v660, 4294901760
        %v1443 = vsub.f32 %v660, %v1442
        %v1444 = vand.u32 %v1443, 4294901760
        %v1445 = vsub.f32 %v1443, %v1444
        %v1446 = vand.u32 %v1445, 4294901760
        %1447 = vmatmul.mubr.f32.gmra.mrb[0].mxu0 %v1446
        %v1448 = vpop.f32.mrb[0].mxu0
        %v1449 = vadd.f32 %v651, %v1448
        %v1450 = vpop.f32.mrb[0].mxu0
        %v1451 = vadd.f32 %v651, %v1450
        %1452 = vmatprep.mubr.f32.mxu0 0.0
        %v1453 = vand.u32 %v663, 4294901760
        %v1454 = vsub.f32 %v663, %v1453
        %v1455 = vand.u32 %v1454, 4294901760
        %v1456 = vsub.f32 %v1454, %v1455
        %v1457 = vand.u32 %v1456, 4294901760
        %1458 = vmatmul.mubr.f32.gmra.mrb[0].mxu0 %v1457
        %v1459 = vpop.f32.mrb[0].mxu0
        %v1460 = vadd.f32 %v656, %v1459
        %v1461 = vpop.f32.mrb[0].mxu0
        %v1462 = vadd.f32 %v656, %v1461
        %1463 = vdwg.mxu0
        %v1464 = vand.u32 %v615, 4294901760
        %v1465 = vsub.f32 %v615, %v1464
        %v1466 = vand.u32 %v1465, 4294901760
        %v1467 = vsub.f32 %v1465, %v1466
        %v1468 = vand.u32 %v1467, 4294901760
        %1469 = vmatprep.subr.mxu0 %v1468
        %v1470 = vand.u32 %v614, 4294901760
        %v1471 = vsub.f32 %v614, %v1470
        %v1472 = vand.u32 %v1471, 4294901760
        %v1473 = vsub.f32 %v1471, %v1472
        %v1474 = vand.u32 %v1473, 4294901760
        %1475 = vmatpush1.msra.mxu0 %v1474
        %v1476 = vand.u32 %v619, 4294901760
        %v1477 = vsub.f32 %v619, %v1476
        %v1478 = vand.u32 %v1477, 4294901760
        %v1479 = vsub.f32 %v1477, %v1478
        %v1480 = vand.u32 %v1479, 4294901760
        %1481 = vmatprep.subr.mxu0 %v1480
        %v1482 = vand.u32 %v618, 4294901760
        %v1483 = vsub.f32 %v618, %v1482
        %v1484 = vand.u32 %v1483, 4294901760
        %v1485 = vsub.f32 %v1483, %v1484
        %v1486 = vand.u32 %v1485, 4294901760
        %1487 = vmatpush1.msra.mxu0 %v1486
        %v1488 = vand.u32 %v623, 4294901760
        %v1489 = vsub.f32 %v623, %v1488
        %v1490 = vand.u32 %v1489, 4294901760
        %v1491 = vsub.f32 %v1489, %v1490
        %v1492 = vand.u32 %v1491, 4294901760
        %1493 = vmatprep.subr.mxu0 %v1492
        %v1494 = vand.u32 %v622, 4294901760
        %v1495 = vsub.f32 %v622, %v1494
        %v1496 = vand.u32 %v1495, 4294901760
        %v1497 = vsub.f32 %v1495, %v1496
        %v1498 = vand.u32 %v1497, 4294901760
        %1499 = vmatpush1.msra.mxu0 %v1498
        %v1500 = vand.u32 %v627, 4294901760
        %v1501 = vsub.f32 %v627, %v1500
        %v1502 = vand.u32 %v1501, 4294901760
        %v1503 = vsub.f32 %v1501, %v1502
        %v1504 = vand.u32 %v1503, 4294901760
        %1505 = vmatprep.subr.mxu0 %v1504
        %v1506 = vand.u32 %v626, 4294901760
        %v1507 = vsub.f32 %v626, %v1506
        %v1508 = vand.u32 %v1507, 4294901760
        %v1509 = vsub.f32 %v1507, %v1508
        %v1510 = vand.u32 %v1509, 4294901760
        %1511 = vmatpush1.msra.mxu0 %v1510
        %v1512 = vand.u32 %v631, 4294901760
        %v1513 = vsub.f32 %v631, %v1512
        %v1514 = vand.u32 %v1513, 4294901760
        %v1515 = vsub.f32 %v1513, %v1514
        %v1516 = vand.u32 %v1515, 4294901760
        %1517 = vmatprep.subr.mxu0 %v1516
        %v1518 = vand.u32 %v630, 4294901760
        %v1519 = vsub.f32 %v630, %v1518
        %v1520 = vand.u32 %v1519, 4294901760
        %v1521 = vsub.f32 %v1519, %v1520
        %v1522 = vand.u32 %v1521, 4294901760
        %1523 = vmatpush1.msra.mxu0 %v1522
        %v1524 = vand.u32 %v635, 4294901760
        %v1525 = vsub.f32 %v635, %v1524
        %v1526 = vand.u32 %v1525, 4294901760
        %v1527 = vsub.f32 %v1525, %v1526
        %v1528 = vand.u32 %v1527, 4294901760
        %1529 = vmatprep.subr.mxu0 %v1528
        %v1530 = vand.u32 %v634, 4294901760
        %v1531 = vsub.f32 %v634, %v1530
        %v1532 = vand.u32 %v1531, 4294901760
        %v1533 = vsub.f32 %v1531, %v1532
        %v1534 = vand.u32 %v1533, 4294901760
        %1535 = vmatpush1.msra.mxu0 %v1534
        %v1536 = vand.u32 %v639, 4294901760
        %v1537 = vsub.f32 %v639, %v1536
        %v1538 = vand.u32 %v1537, 4294901760
        %v1539 = vsub.f32 %v1537, %v1538
        %v1540 = vand.u32 %v1539, 4294901760
        %1541 = vmatprep.subr.mxu0 %v1540
        %v1542 = vand.u32 %v638, 4294901760
        %v1543 = vsub.f32 %v638, %v1542
        %v1544 = vand.u32 %v1543, 4294901760
        %v1545 = vsub.f32 %v1543, %v1544
        %v1546 = vand.u32 %v1545, 4294901760
        %1547 = vmatpush1.msra.mxu0 %v1546
        %v1548 = vand.u32 %v643, 4294901760
        %v1549 = vsub.f32 %v643, %v1548
        %v1550 = vand.u32 %v1549, 4294901760
        %v1551 = vsub.f32 %v1549, %v1550
        %v1552 = vand.u32 %v1551, 4294901760
        %1553 = vmatprep.subr.mxu0 %v1552
        %v1554 = vand.u32 %v642, 4294901760
        %v1555 = vsub.f32 %v642, %v1554
        %v1556 = vand.u32 %v1555, 4294901760
        %v1557 = vsub.f32 %v1555, %v1556
        %v1558 = vand.u32 %v1557, 4294901760
        %1559 = vmatpush1.msra.mxu0 %v1558
        %1560 = vmatprep.subr.mxu0 0.0
        %1561 = vmatpush1.msra.mxu0 0.0
        %1562 = vmatprep.subr.mxu0 0.0
        %1563 = vmatpush1.msra.mxu0 0.0
        %1564 = vmatprep.subr.mxu0 0.0
        %1565 = vmatpush1.msra.mxu0 0.0
        %1566 = vmatprep.subr.mxu0 0.0
        %1567 = vmatpush1.msra.mxu0 0.0
        %1568 = vmatprep.subr.mxu0 0.0
        %1569 = vmatpush1.msra.mxu0 0.0
        %1570 = vmatprep.subr.mxu0 0.0
        %1571 = vmatpush1.msra.mxu0 0.0
        %1572 = vmatprep.subr.mxu0 0.0
        %1573 = vmatpush1.msra.mxu0 0.0
        %1574 = vmatprep.subr.mxu0 0.0
        %1575 = vmatpush1.msra.mxu0 0.0
        %1576 = vmatprep.subr.mxu0 0.0
        %1577 = vmatpush1.msra.mxu0 0.0
        %1578 = vmatprep.subr.mxu0 0.0
        %1579 = vmatpush1.msra.mxu0 0.0
        %1580 = vmatprep.subr.mxu0 0.0
        %1581 = vmatpush1.msra.mxu0 0.0
        %1582 = vmatprep.subr.mxu0 0.0
        %1583 = vmatpush1.msra.mxu0 0.0
        %1584 = vmatprep.subr.mxu0 0.0
        %1585 = vmatpush1.msra.mxu0 0.0
        %1586 = vmatprep.subr.mxu0 0.0
        %1587 = vmatpush1.msra.mxu0 0.0
        %1588 = vmatprep.subr.mxu0 0.0
        %1589 = vmatpush1.msra.mxu0 0.0
        %1590 = vmatprep.subr.mxu0 0.0
        %1591 = vmatpush1.msra.mxu0 0.0
        %1592 = vmatprep.subr.mxu0 0.0
        %1593 = vmatpush1.msra.mxu0 0.0
        %1594 = vmatprep.subr.mxu0 0.0
        %1595 = vmatpush1.msra.mxu0 0.0
        %1596 = vmatprep.subr.mxu0 0.0
        %1597 = vmatpush1.msra.mxu0 0.0
        %1598 = vmatprep.subr.mxu0 0.0
        %1599 = vmatpush1.msra.mxu0 0.0
        %1600 = vmatprep.subr.mxu0 0.0
        %1601 = vmatpush1.msra.mxu0 0.0
        %1602 = vmatprep.subr.mxu0 0.0
        %1603 = vmatpush1.msra.mxu0 0.0
        %1604 = vmatprep.subr.mxu0 0.0
        %1605 = vmatpush1.msra.mxu0 0.0
        %1606 = vmatprep.subr.mxu0 0.0
        %1607 = vmatpush1.msra.mxu0 0.0
        %1608 = vmatprep.mubr.f32.mxu0 0.0
        %v1609 = vand.u32 %v660, 4294901760
        %1610 = vmatmul.mubr.f32.gmra.mrb[0].mxu0 %v1609
        %v1611 = vpop.f32.mrb[0].mxu0
        %v1612 = vadd.f32 %v1449, %v1611
        %v1613 = vpop.f32.mrb[0].mxu0
        %v1614 = vadd.f32 %v1451, %v1613
        %1615 = vmatprep.mubr.f32.mxu0 0.0
        %v1616 = vand.u32 %v663, 4294901760
        %1617 = vmatmul.mubr.f32.gmra.mrb[0].mxu0 %v1616
        %v1618 = vpop.f32.mrb[0].mxu0
        %v1619 = vadd.f32 %v1460, %v1618
        %v1620 = vpop.f32.mrb[0].mxu0
        %v1621 = vadd.f32 %v1462, %v1620
        %1622 = vdwg.mxu0
        %v1623 = vand.u32 %v615, 4294901760
        %v1624 = vsub.f32 %v615, %v1623
        %1625 = vmatprep.subr.mxu0 %v1624
        %v1626 = vand.u32 %v614, 4294901760
        %v1627 = vsub.f32 %v614, %v1626
        %1628 = vmatpush1.msra.mxu0 %v1627
        %v1629 = vand.u32 %v619, 4294901760
        %v1630 = vsub.f32 %v619, %v1629
        %1631 = vmatprep.subr.mxu0 %v1630
        %v1632 = vand.u32 %v618, 4294901760
        %v1633 = vsub.f32 %v618, %v1632
        %1634 = vmatpush1.msra.mxu0 %v1633
        %v1635 = vand.u32 %v623, 4294901760
        %v1636 = vsub.f32 %v623, %v1635
        %1637 = vmatprep.subr.mxu0 %v1636
        %v1638 = vand.u32 %v622, 4294901760
        %v1639 = vsub.f32 %v622, %v1638
        %1640 = vmatpush1.msra.mxu0 %v1639
        %v1641 = vand.u32 %v627, 4294901760
        %v1642 = vsub.f32 %v627, %v1641
        %1643 = vmatprep.subr.mxu0 %v1642
        %v1644 = vand.u32 %v626, 4294901760
        %v1645 = vsub.f32 %v626, %v1644
        %1646 = vmatpush1.msra.mxu0 %v1645
        %v1647 = vand.u32 %v631, 4294901760
        %v1648 = vsub.f32 %v631, %v1647
        %1649 = vmatprep.subr.mxu0 %v1648
        %v1650 = vand.u32 %v630, 4294901760
        %v1651 = vsub.f32 %v630, %v1650
        %1652 = vmatpush1.msra.mxu0 %v1651
        %v1653 = vand.u32 %v635, 4294901760
        %v1654 = vsub.f32 %v635, %v1653
        %1655 = vmatprep.subr.mxu0 %v1654
        %v1656 = vand.u32 %v634, 4294901760
        %v1657 = vsub.f32 %v634, %v1656
        %1658 = vmatpush1.msra.mxu0 %v1657
        %v1659 = vand.u32 %v639, 4294901760
        %v1660 = vsub.f32 %v639, %v1659
        %1661 = vmatprep.subr.mxu0 %v1660
        %v1662 = vand.u32 %v638, 4294901760
        %v1663 = vsub.f32 %v638, %v1662
        %1664 = vmatpush1.msra.mxu0 %v1663
        %v1665 = vand.u32 %v643, 4294901760
        %v1666 = vsub.f32 %v643, %v1665
        %1667 = vmatprep.subr.mxu0 %v1666
        %v1668 = vand.u32 %v642, 4294901760
        %v1669 = vsub.f32 %v642, %v1668
        %1670 = vmatpush1.msra.mxu0 %v1669
        %1671 = vmatprep.subr.mxu0 0.0
        %1672 = vmatpush1.msra.mxu0 0.0
        %1673 = vmatprep.subr.mxu0 0.0
        %1674 = vmatpush1.msra.mxu0 0.0
        %1675 = vmatprep.subr.mxu0 0.0
        %1676 = vmatpush1.msra.mxu0 0.0
        %1677 = vmatprep.subr.mxu0 0.0
        %1678 = vmatpush1.msra.mxu0 0.0
        %1679 = vmatprep.subr.mxu0 0.0
        %1680 = vmatpush1.msra.mxu0 0.0
        %1681 = vmatprep.subr.mxu0 0.0
        %1682 = vmatpush1.msra.mxu0 0.0
        %1683 = vmatprep.subr.mxu0 0.0
        %1684 = vmatpush1.msra.mxu0 0.0
        %1685 = vmatprep.subr.mxu0 0.0
        %1686 = vmatpush1.msra.mxu0 0.0
        %1687 = vmatprep.subr.mxu0 0.0
        %1688 = vmatpush1.msra.mxu0 0.0
        %1689 = vmatprep.subr.mxu0 0.0
        %1690 = vmatpush1.msra.mxu0 0.0
        %1691 = vmatprep.subr.mxu0 0.0
        %1692 = vmatpush1.msra.mxu0 0.0
        %1693 = vmatprep.subr.mxu0 0.0
        %1694 = vmatpush1.msra.mxu0 0.0
        %1695 = vmatprep.subr.mxu0 0.0
        %1696 = vmatpush1.msra.mxu0 0.0
        %1697 = vmatprep.subr.mxu0 0.0
        %1698 = vmatpush1.msra.mxu0 0.0
        %1699 = vmatprep.subr.mxu0 0.0
        %1700 = vmatpush1.msra.mxu0 0.0
        %1701 = vmatprep.subr.mxu0 0.0
        %1702 = vmatpush1.msra.mxu0 0.0
        %1703 = vmatprep.subr.mxu0 0.0
        %1704 = vmatpush1.msra.mxu0 0.0
        %1705 = vmatprep.subr.mxu0 0.0
        %1706 = vmatpush1.msra.mxu0 0.0
        %1707 = vmatprep.subr.mxu0 0.0
        %1708 = vmatpush1.msra.mxu0 0.0
        %1709 = vmatprep.subr.mxu0 0.0
        %1710 = vmatpush1.msra.mxu0 0.0
        %1711 = vmatprep.subr.mxu0 0.0
        %1712 = vmatpush1.msra.mxu0 0.0
        %1713 = vmatprep.subr.mxu0 0.0
        %1714 = vmatpush1.msra.mxu0 0.0
        %1715 = vmatprep.subr.mxu0 0.0
        %1716 = vmatpush1.msra.mxu0 0.0
        %1717 = vmatprep.subr.mxu0 0.0
        %1718 = vmatpush1.msra.mxu0 0.0
        %1719 = vmatprep.mubr.f32.mxu0 0.0
        %v1720 = vand.u32 %v660, 4294901760
        %v1721 = vsub.f32 %v660, %v1720
        %1722 = vmatmul.mubr.f32.gmra.mrb[0].mxu0 %v1721
        %v1723 = vpop.f32.mrb[0].mxu0
        %v1724 = vadd.f32 %v1612, %v1723
        %v1725 = vpop.f32.mrb[0].mxu0
        %v1726 = vadd.f32 %v1614, %v1725
        %1727 = vmatprep.mubr.f32.mxu0 0.0
        %v1728 = vand.u32 %v663, 4294901760
        %v1729 = vsub.f32 %v663, %v1728
        %1730 = vmatmul.mubr.f32.gmra.mrb[0].mxu0 %v1729
        %v1731 = vpop.f32.mrb[0].mxu0
        %v1732 = vadd.f32 %v1619, %v1731
        %v1733 = vpop.f32.mrb[0].mxu0
        %v1734 = vadd.f32 %v1621, %v1733
        %1735 = vdwg.mxu0
        %v1736 = vand.u32 %v615, 4294901760
        %1737 = vmatprep.subr.mxu0 %v1736
        %v1738 = vand.u32 %v614, 4294901760
        %1739 = vmatpush1.msra.mxu0 %v1738
        %v1740 = vand.u32 %v619, 4294901760
        %1741 = vmatprep.subr.mxu0 %v1740
        %v1742 = vand.u32 %v618, 4294901760
        %1743 = vmatpush1.msra.mxu0 %v1742
        %v1744 = vand.u32 %v623, 4294901760
        %1745 = vmatprep.subr.mxu0 %v1744
        %v1746 = vand.u32 %v622, 4294901760
        %1747 = vmatpush1.msra.mxu0 %v1746
        %v1748 = vand.u32 %v627, 4294901760
        %1749 = vmatprep.subr.mxu0 %v1748
        %v1750 = vand.u32 %v626, 4294901760
        %1751 = vmatpush1.msra.mxu0 %v1750
        %v1752 = vand.u32 %v631, 4294901760
        %1753 = vmatprep.subr.mxu0 %v1752
        %v1754 = vand.u32 %v630, 4294901760
        %1755 = vmatpush1.msra.mxu0 %v1754
        %v1756 = vand.u32 %v635, 4294901760
        %1757 = vmatprep.subr.mxu0 %v1756
        %v1758 = vand.u32 %v634, 4294901760
        %1759 = vmatpush1.msra.mxu0 %v1758
        %v1760 = vand.u32 %v639, 4294901760
        %1761 = vmatprep.subr.mxu0 %v1760
        %v1762 = vand.u32 %v638, 4294901760
        %1763 = vmatpush1.msra.mxu0 %v1762
        %v1764 = vand.u32 %v643, 4294901760
        %1765 = vmatprep.subr.mxu0 %v1764
        %v1766 = vand.u32 %v642, 4294901760
        %1767 = vmatpush1.msra.mxu0 %v1766
        %1768 = vmatprep.subr.mxu0 0.0
        %1769 = vmatpush1.msra.mxu0 0.0
        %1770 = vmatprep.subr.mxu0 0.0
        %1771 = vmatpush1.msra.mxu0 0.0
        %1772 = vmatprep.subr.mxu0 0.0
        %1773 = vmatpush1.msra.mxu0 0.0
        %1774 = vmatprep.subr.mxu0 0.0
        %1775 = vmatpush1.msra.mxu0 0.0
        %1776 = vmatprep.subr.mxu0 0.0
        %1777 = vmatpush1.msra.mxu0 0.0
        %1778 = vmatprep.subr.mxu0 0.0
        %1779 = vmatpush1.msra.mxu0 0.0
        %1780 = vmatprep.subr.mxu0 0.0
        %1781 = vmatpush1.msra.mxu0 0.0
        %1782 = vmatprep.subr.mxu0 0.0
        %1783 = vmatpush1.msra.mxu0 0.0
        %1784 = vmatprep.subr.mxu0 0.0
        %1785 = vmatpush1.msra.mxu0 0.0
        %1786 = vmatprep.subr.mxu0 0.0
        %1787 = vmatpush1.msra.mxu0 0.0
        %1788 = vmatprep.subr.mxu0 0.0
        %1789 = vmatpush1.msra.mxu0 0.0
        %1790 = vmatprep.subr.mxu0 0.0
        %1791 = vmatpush1.msra.mxu0 0.0
        %1792 = vmatprep.subr.mxu0 0.0
        %1793 = vmatpush1.msra.mxu0 0.0
        %1794 = vmatprep.subr.mxu0 0.0
        %1795 = vmatpush1.msra.mxu0 0.0
        %1796 = vmatprep.subr.mxu0 0.0
        %1797 = vmatpush1.msra.mxu0 0.0
        %1798 = vmatprep.subr.mxu0 0.0
        %1799 = vmatpush1.msra.mxu0 0.0
        %1800 = vmatprep.subr.mxu0 0.0
        %1801 = vmatpush1.msra.mxu0 0.0
        %1802 = vmatprep.subr.mxu0 0.0
        %1803 = vmatpush1.msra.mxu0 0.0
        %1804 = vmatprep.subr.mxu0 0.0
        %1805 = vmatpush1.msra.mxu0 0.0
        %1806 = vmatprep.subr.mxu0 0.0
        %1807 = vmatpush1.msra.mxu0 0.0
        %1808 = vmatprep.subr.mxu0 0.0
        %1809 = vmatpush1.msra.mxu0 0.0
        %1810 = vmatprep.subr.mxu0 0.0
        %1811 = vmatpush1.msra.mxu0 0.0
        %1812 = vmatprep.subr.mxu0 0.0
        %1813 = vmatpush1.msra.mxu0 0.0
        %1814 = vmatprep.subr.mxu0 0.0
        %1815 = vmatpush1.msra.mxu0 0.0
        %1816 = vmatprep.mubr.f32.mxu0 0.0
        %v1817 = vand.u32 %v660, 4294901760
        %v1818 = vsub.f32 %v660, %v1817
        %v1819 = vand.u32 %v1818, 4294901760
        %1820 = vmatmul.mubr.f32.gmra.mrb[0].mxu0 %v1819
        %v1821 = vpop.f32.mrb[0].mxu0
        %v1822 = vadd.f32 %v1724, %v1821
        %v1823 = vpop.f32.mrb[0].mxu0
        %v1824 = vadd.f32 %v1726, %v1823
        %1825 = vmatprep.mubr.f32.mxu0 0.0
        %v1826 = vand.u32 %v663, 4294901760
        %v1827 = vsub.f32 %v663, %v1826
        %v1828 = vand.u32 %v1827, 4294901760
        %1829 = vmatmul.mubr.f32.gmra.mrb[0].mxu0 %v1828
        %v1830 = vpop.f32.mrb[0].mxu0
        %v1831 = vadd.f32 %v1732, %v1830
        %v1832 = vpop.f32.mrb[0].mxu0
        %v1833 = vadd.f32 %v1734, %v1832
        %1834 = vdwg.mxu0
        %v1835 = vand.u32 %v615, 4294901760
        %v1836 = vsub.f32 %v615, %v1835
        %v1837 = vand.u32 %v1836, 4294901760
        %1838 = vmatprep.subr.mxu0 %v1837
        %v1839 = vand.u32 %v614, 4294901760
        %v1840 = vsub.f32 %v614, %v1839
        %v1841 = vand.u32 %v1840, 4294901760
        %1842 = vmatpush1.msra.mxu0 %v1841
        %v1843 = vand.u32 %v619, 4294901760
        %v1844 = vsub.f32 %v619, %v1843
        %v1845 = vand.u32 %v1844, 4294901760
        %1846 = vmatprep.subr.mxu0 %v1845
        %v1847 = vand.u32 %v618, 4294901760
        %v1848 = vsub.f32 %v618, %v1847
        %v1849 = vand.u32 %v1848, 4294901760
        %1850 = vmatpush1.msra.mxu0 %v1849
        %v1851 = vand.u32 %v623, 4294901760
        %v1852 = vsub.f32 %v623, %v1851
        %v1853 = vand.u32 %v1852, 4294901760
        %1854 = vmatprep.subr.mxu0 %v1853
        %v1855 = vand.u32 %v622, 4294901760
        %v1856 = vsub.f32 %v622, %v1855
        %v1857 = vand.u32 %v1856, 4294901760
        %1858 = vmatpush1.msra.mxu0 %v1857
        %v1859 = vand.u32 %v627, 4294901760
        %v1860 = vsub.f32 %v627, %v1859
        %v1861 = vand.u32 %v1860, 4294901760
        %1862 = vmatprep.subr.mxu0 %v1861
        %v1863 = vand.u32 %v626, 4294901760
        %v1864 = vsub.f32 %v626, %v1863
        %v1865 = vand.u32 %v1864, 4294901760
        %1866 = vmatpush1.msra.mxu0 %v1865
        %v1867 = vand.u32 %v631, 4294901760
        %v1868 = vsub.f32 %v631, %v1867
        %v1869 = vand.u32 %v1868, 4294901760
        %1870 = vmatprep.subr.mxu0 %v1869
        %v1871 = vand.u32 %v630, 4294901760
        %v1872 = vsub.f32 %v630, %v1871
        %v1873 = vand.u32 %v1872, 4294901760
        %1874 = vmatpush1.msra.mxu0 %v1873
        %v1875 = vand.u32 %v635, 4294901760
        %v1876 = vsub.f32 %v635, %v1875
        %v1877 = vand.u32 %v1876, 4294901760
        %1878 = vmatprep.subr.mxu0 %v1877
        %v1879 = vand.u32 %v634, 4294901760
        %v1880 = vsub.f32 %v634, %v1879
        %v1881 = vand.u32 %v1880, 4294901760
        %1882 = vmatpush1.msra.mxu0 %v1881
        %v1883 = vand.u32 %v639, 4294901760
        %v1884 = vsub.f32 %v639, %v1883
        %v1885 = vand.u32 %v1884, 4294901760
        %1886 = vmatprep.subr.mxu0 %v1885
        %v1887 = vand.u32 %v638, 4294901760
        %v1888 = vsub.f32 %v638, %v1887
        %v1889 = vand.u32 %v1888, 4294901760
        %1890 = vmatpush1.msra.mxu0 %v1889
        %v1891 = vand.u32 %v643, 4294901760
        %v1892 = vsub.f32 %v643, %v1891
        %v1893 = vand.u32 %v1892, 4294901760
        %1894 = vmatprep.subr.mxu0 %v1893
        %v1895 = vand.u32 %v642, 4294901760
        %v1896 = vsub.f32 %v642, %v1895
        %v1897 = vand.u32 %v1896, 4294901760
        %1898 = vmatpush1.msra.mxu0 %v1897
        %1899 = vmatprep.subr.mxu0 0.0
        %1900 = vmatpush1.msra.mxu0 0.0
        %1901 = vmatprep.subr.mxu0 0.0
        %1902 = vmatpush1.msra.mxu0 0.0
        %1903 = vmatprep.subr.mxu0 0.0
        %1904 = vmatpush1.msra.mxu0 0.0
        %1905 = vmatprep.subr.mxu0 0.0
        %1906 = vmatpush1.msra.mxu0 0.0
        %1907 = vmatprep.subr.mxu0 0.0
        %1908 = vmatpush1.msra.mxu0 0.0
        %1909 = vmatprep.subr.mxu0 0.0
        %1910 = vmatpush1.msra.mxu0 0.0
        %1911 = vmatprep.subr.mxu0 0.0
        %1912 = vmatpush1.msra.mxu0 0.0
        %1913 = vmatprep.subr.mxu0 0.0
        %1914 = vmatpush1.msra.mxu0 0.0
        %1915 = vmatprep.subr.mxu0 0.0
        %1916 = vmatpush1.msra.mxu0 0.0
        %1917 = vmatprep.subr.mxu0 0.0
        %1918 = vmatpush1.msra.mxu0 0.0
        %1919 = vmatprep.subr.mxu0 0.0
        %1920 = vmatpush1.msra.mxu0 0.0
        %1921 = vmatprep.subr.mxu0 0.0
        %1922 = vmatpush1.msra.mxu0 0.0
        %1923 = vmatprep.subr.mxu0 0.0
        %1924 = vmatpush1.msra.mxu0 0.0
        %1925 = vmatprep.subr.mxu0 0.0
        %1926 = vmatpush1.msra.mxu0 0.0
        %1927 = vmatprep.subr.mxu0 0.0
        %1928 = vmatpush1.msra.mxu0 0.0
        %1929 = vmatprep.subr.mxu0 0.0
        %1930 = vmatpush1.msra.mxu0 0.0
        %1931 = vmatprep.subr.mxu0 0.0
        %1932 = vmatpush1.msra.mxu0 0.0
        %1933 = vmatprep.subr.mxu0 0.0
        %1934 = vmatpush1.msra.mxu0 0.0
        %1935 = vmatprep.subr.mxu0 0.0
        %1936 = vmatpush1.msra.mxu0 0.0
        %1937 = vmatprep.subr.mxu0 0.0
        %1938 = vmatpush1.msra.mxu0 0.0
        %1939 = vmatprep.subr.mxu0 0.0
        %1940 = vmatpush1.msra.mxu0 0.0
        %1941 = vmatprep.subr.mxu0 0.0
        %1942 = vmatpush1.msra.mxu0 0.0
        %1943 = vmatprep.subr.mxu0 0.0
        %1944 = vmatpush1.msra.mxu0 0.0
        %1945 = vmatprep.subr.mxu0 0.0
        %1946 = vmatpush1.msra.mxu0 0.0
        %1947 = vmatprep.mubr.f32.mxu0 0.0
        %v1948 = vand.u32 %v660, 4294901760
        %1949 = vmatmul.mubr.f32.gmra.mrb[0].mxu0 %v1948
        %v1950 = vpop.f32.mrb[0].mxu0
        %v1951 = vadd.f32 %v1822, %v1950
        %v1952 = vpop.f32.mrb[0].mxu0
        %v1953 = vadd.f32 %v1824, %v1952
        %1954 = vmatprep.mubr.f32.mxu0 0.0
        %v1955 = vand.u32 %v663, 4294901760
        %1956 = vmatmul.mubr.f32.gmra.mrb[0].mxu0 %v1955
        %v1957 = vpop.f32.mrb[0].mxu0
        %v1958 = vadd.f32 %v1831, %v1957
        %v1959 = vpop.f32.mrb[0].mxu0
        %v1960 = vadd.f32 %v1833, %v1959
        %1961 = vdwg.mxu0
        %v1962 = vand.u32 %v615, 4294901760
        %1963 = vmatprep.subr.mxu0 %v1962
        %v1964 = vand.u32 %v614, 4294901760
        %1965 = vmatpush1.msra.mxu0 %v1964
        %v1966 = vand.u32 %v619, 4294901760
        %1967 = vmatprep.subr.mxu0 %v1966
        %v1968 = vand.u32 %v618, 4294901760
        %1969 = vmatpush1.msra.mxu0 %v1968
        %v1970 = vand.u32 %v623, 4294901760
        %1971 = vmatprep.subr.mxu0 %v1970
        %v1972 = vand.u32 %v622, 4294901760
        %1973 = vmatpush1.msra.mxu0 %v1972
        %v1974 = vand.u32 %v627, 4294901760
        %1975 = vmatprep.subr.mxu0 %v1974
        %v1976 = vand.u32 %v626, 4294901760
        %1977 = vmatpush1.msra.mxu0 %v1976
        %v1978 = vand.u32 %v631, 4294901760
        %1979 = vmatprep.subr.mxu0 %v1978
        %v1980 = vand.u32 %v630, 4294901760
        %1981 = vmatpush1.msra.mxu0 %v1980
        %v1982 = vand.u32 %v635, 4294901760
        %1983 = vmatprep.subr.mxu0 %v1982
        %v1984 = vand.u32 %v634, 4294901760
        %1985 = vmatpush1.msra.mxu0 %v1984
        %v1986 = vand.u32 %v639, 4294901760
        %1987 = vmatprep.subr.mxu0 %v1986
        %v1988 = vand.u32 %v638, 4294901760
        %1989 = vmatpush1.msra.mxu0 %v1988
        %v1990 = vand.u32 %v643, 4294901760
        %1991 = vmatprep.subr.mxu0 %v1990
        %v1992 = vand.u32 %v642, 4294901760
        %1993 = vmatpush1.msra.mxu0 %v1992
        %1994 = vmatprep.subr.mxu0 0.0
        %1995 = vmatpush1.msra.mxu0 0.0
        %1996 = vmatprep.subr.mxu0 0.0
        %1997 = vmatpush1.msra.mxu0 0.0
        %1998 = vmatprep.subr.mxu0 0.0
        %1999 = vmatpush1.msra.mxu0 0.0
        %2000 = vmatprep.subr.mxu0 0.0
        %2001 = vmatpush1.msra.mxu0 0.0
        %2002 = vmatprep.subr.mxu0 0.0
        %2003 = vmatpush1.msra.mxu0 0.0
        %2004 = vmatprep.subr.mxu0 0.0
        %2005 = vmatpush1.msra.mxu0 0.0
        %2006 = vmatprep.subr.mxu0 0.0
        %2007 = vmatpush1.msra.mxu0 0.0
        %2008 = vmatprep.subr.mxu0 0.0
        %2009 = vmatpush1.msra.mxu0 0.0
        %2010 = vmatprep.subr.mxu0 0.0
        %2011 = vmatpush1.msra.mxu0 0.0
        %2012 = vmatprep.subr.mxu0 0.0
        %2013 = vmatpush1.msra.mxu0 0.0
        %2014 = vmatprep.subr.mxu0 0.0
        %2015 = vmatpush1.msra.mxu0 0.0
        %2016 = vmatprep.subr.mxu0 0.0
        %2017 = vmatpush1.msra.mxu0 0.0
        %2018 = vmatprep.subr.mxu0 0.0
        %2019 = vmatpush1.msra.mxu0 0.0
        %2020 = vmatprep.subr.mxu0 0.0
        %2021 = vmatpush1.msra.mxu0 0.0
        %2022 = vmatprep.subr.mxu0 0.0
        %2023 = vmatpush1.msra.mxu0 0.0
        %2024 = vmatprep.subr.mxu0 0.0
        %2025 = vmatpush1.msra.mxu0 0.0
        %2026 = vmatprep.subr.mxu0 0.0
        %2027 = vmatpush1.msra.mxu0 0.0
        %2028 = vmatprep.subr.mxu0 0.0
        %2029 = vmatpush1.msra.mxu0 0.0
        %2030 = vmatprep.subr.mxu0 0.0
        %2031 = vmatpush1.msra.mxu0 0.0
        %2032 = vmatprep.subr.mxu0 0.0
        %2033 = vmatpush1.msra.mxu0 0.0
        %2034 = vmatprep.subr.mxu0 0.0
        %2035 = vmatpush1.msra.mxu0 0.0
        %2036 = vmatprep.subr.mxu0 0.0
        %2037 = vmatpush1.msra.mxu0 0.0
        %2038 = vmatprep.subr.mxu0 0.0
        %2039 = vmatpush1.msra.mxu0 0.0
        %2040 = vmatprep.subr.mxu0 0.0
        %2041 = vmatpush1.msra.mxu0 0.0
        %2042 = vmatprep.mubr.f32.mxu0 0.0
        %v2043 = vand.u32 %v660, 4294901760
        %2044 = vmatmul.mubr.f32.gmra.mrb[0].mxu0 %v2043
        %v2045 = vpop.f32.mrb[0].mxu0
        %v2046 = vadd.f32 %v1951, %v2045
        %v2047 = vpop.f32.mrb[0].mxu0
        %v2048 = vadd.f32 %v1953, %v2047
        %2049 = vmatprep.mubr.f32.mxu0 0.0
        %v2050 = vand.u32 %v663, 4294901760
        %2051 = vmatmul.mubr.f32.gmra.mrb[0].mxu0 %v2050
        %v2052 = vpop.f32.mrb[0].mxu0
        %v2053 = vadd.f32 %v1958, %v2052
        %v2054 = vpop.f32.mrb[0].mxu0
        %v2055 = vadd.f32 %v1960, %v2054
        %2056 = vdwg.mxu0
        %v2057 = vmax.f32 %v1350, 0.0
        %v2058 = vmax.f32 %v1352, 0.0
        %v2059 = vmax.f32 %v2046, 0.0
        %v2060 = vmax.f32 %v2048, 0.0
        %v2061 = vmax.f32 %v1357, 0.0
        %v2062 = vmax.f32 %v1359, 0.0
        %v2063 = vmax.f32 %v2053, 0.0
        %v2064 = vmax.f32 %v2055, 0.0
        %v2065 = vld [vmem:[%s5] sm:$0xff]
        %v2066 = vld [vmem:[%s5 + $0x8] sm:$0xff]
        %2068 = vset.pattern.permute.xlu0 0
        %2069 = vperm.xlu0 %2068, %v2065
        %v2070 = vpop.permute.xlu0 %2069
        %2073 = vset.pattern.permute.xlu0 0
        %2074 = vperm.xlu0 %2073, %v2066
        %v2075 = vpop.permute.xlu0 %2074
        %v2077 = vmul.f32 %v2057, %v2070
        %v2078 = vmul.f32 %v2058, %v2070
        %v2079 = vmul.f32 %v2059, %v2070
        %v2080 = vmul.f32 %v2060, %v2070
        %v2081 = vmul.f32 %v2061, %v2075
        %v2082 = vmul.f32 %v2062, %v2075
        %v2083 = vmul.f32 %v2063, %v2075
        %v2084 = vmul.f32 %v2064, %v2075
        %v2085 = vadd.f32 %v2077, %v2081
        %v2086 = vrot.slane %v2085, 4
        %v2087 = vadd.f32 %v2085, %v2086
        %v2088 = vrot.slane %v2087, 2
        %v2089 = vadd.f32 %v2087, %v2088
        %v2090 = vrot.slane %v2089, 1
        %v2091 = vadd.f32 %v2089, %v2090
        %v2092 = vadd.f32 %v2078, %v2082
        %v2093 = vrot.slane %v2092, 4
        %v2094 = vadd.f32 %v2092, %v2093
        %v2095 = vrot.slane %v2094, 2
        %v2096 = vadd.f32 %v2094, %v2095
        %v2097 = vrot.slane %v2096, 1
        %v2098 = vadd.f32 %v2096, %v2097
        %v2099 = vadd.f32 %v2079, %v2083
        %v2100 = vrot.slane %v2099, 4
        %v2101 = vadd.f32 %v2099, %v2100
        %v2102 = vrot.slane %v2101, 2
        %v2103 = vadd.f32 %v2101, %v2102
        %v2104 = vrot.slane %v2103, 1
        %v2105 = vadd.f32 %v2103, %v2104
        %v2106 = vadd.f32 %v2080, %v2084
        %v2107 = vrot.slane %v2106, 4
        %v2108 = vadd.f32 %v2106, %v2107
        %v2109 = vrot.slane %v2108, 2
        %v2110 = vadd.f32 %v2108, %v2109
        %v2111 = vrot.slane %v2110, 1
        %v2112 = vadd.f32 %v2110, %v2111
        %v2113 = vld [vmem:[#allocation2] sm:$0x1]
        %2115 = vset.pattern.permute.xlu0 0
        %2116 = vperm.xlu0 %2115, %v2113
        %v2117 = vpop.permute.xlu0 %2116
        %v2119 = vlaneseq
        %v2120 = vshrl.u32 %v2119, 7
        %v2121 = vsub.s32 0, %v2120
        %v2122 = vrot.slane %v2117, %v2121
        %v2123 = vadd.f32 %v2091, %v2122
        %v2124 = vadd.f32 %v2098, %v2122
        %v2125 = vadd.f32 %v2105, %v2122
        %v2126 = vadd.f32 %v2112, %v2122
        %v2131 = vcombine.low %v2123, %v2124
        %v2132 = vcombine.low %v2125, %v2126
        %v2134 = vunpack.c.l.s4 1966171168
        %v2135 = vunpack.c.0.s8 %v2134
        %v2136 = vlaneseq
        %v2137 = vshrl.u32 %v2136, 7
        %v2138 = vsub.s32 %v2135, %v2137
        %v2139 = vrot.slane %v2131, %v2138
        %v2141 = vunpack.c.l.s4 1966171168
        %v2142 = vunpack.c.0.s8 %v2141
        %v2143 = vlaneseq
        %v2144 = vshrl.u32 %v2143, 7
        %v2145 = vsub.s32 %v2142, %v2144
        %v2146 = vrot.slane %v2132, %v2145
        %v2147 = vcombine.low %v2139, %v2146
        %v2149 = vunpack.c.l.s4 1966171168
        %v2150 = vunpack.c.0.s8 %v2149
        %v2151 = vlaneseq
        %v2152 = vshrl.u32 %v2151, 7
        %v2153 = vsub.s32 %v2150, %v2152
        %v2154 = vrot.slane %v2147, %v2153
        %v2156 = vlaneseq
        %vm2157 = vcmp.ge.s32.totalorder %v2156, 0
        %vm2158 = vcmp.lt.s32.totalorder %v2156, 512
        %vm2159 = vmand %vm2157, %vm2158
        %2160 = vst.msk [vmem:[%s274] sm:$0xf] %vm2159, %v2154
        %s2161 = sand.u32 %s183, 1
        %s2162 = scalar_lea.sflag [#allocation4], %s2161
        %s2163 = sand.u32 %s183, 1
        %s2164 = smul.addr %s2163, 4
        %s2165 = scalar_lea.vmem [#allocation3], %s2164
        // Predicated region
        $region49: #{mlp_forward.1} parent=47 // pred_check
          %p2166 = pneg %p193
        $region50: #{mlp_forward.1} parent=47 // pred_check_branch
          %2168 = sbr.rel (%p2166) target = $region52
        $region51: #{mlp_forward.1} parent=47 // pred_region
          %s2169 = smul.u32 4, %s23
          %s2171 = ssub.s32 64, 64
          %2172 = vsyncadd %s2162, %s2171
          %s2173 = smul.addr %s2169, 16
          %s2174 = scalar_lea.hbm %s7, %s2173
          %s2176 = sshll.u32 %s2165, 4
          %s2177 = int_to_ptr.vmem [resolvable:$true] %s2176
          %2179 = dma.vmem_to_hbm [thread:$0]  %s2177, 64, %s2174, %s2162
        $region52: #{mlp_forward.1} parent=47 // pred_fallthru
          _
      $region48: #{mlp_forward.1} parent=5 // pred_fallthru
        _
      %p2180 = scmp.le.s32.totalorder 2, %s18
      // Predicated region
      $region53: #{mlp_forward.1} parent=5 // pred_check
        %p2181 = pneg %p2180
      $region54: #{mlp_forward.1} parent=5 // pred_check_branch
        %2183 = sbr.rel (%p2181) target = $region56
      $region55: #{mlp_forward.1} parent=5 // pred_region
        %s2184 = ssub.s32 %s18, 2
        // Predicated region
        $region57: #{mlp_forward.1} parent=55 // pred_check
          %p2185 = pneg %p199
        $region58: #{mlp_forward.1} parent=55 // pred_check_branch
          %2187 = sbr.rel (%p2185) target = $region60
        $region59: #{mlp_forward.1} parent=55 // pred_region
          %s2188 = sand.u32 %s184, 1
          %s2189 = scalar_lea.sflag [#allocation4], %s2188
          %s2190 = sand.u32 %s184, 1
          %s2191 = smul.addr %s2190, 4
          %s2192 = scalar_lea.vmem [#allocation3], %s2191
          %2193 = dma.done %s2189, 64
        $region60: #{mlp_forward.1} parent=55 // pred_fallthru
          _
      $region56: #{mlp_forward.1} parent=5 // pred_fallthru
        _
    $region6: #{mlp_forward.1} parent=1 // loop_footer
      %s22 = sadd.s32 1, %s18
    $region7: #{mlp_forward.1} parent=1 // loop_footer_branch
      %17 = sbr.rel target = $region3
    $region8: #{mlp_forward.1} parent=1 // loop_exit
      _
    %2194 = vsyncpa [#allocation4], 1
    %s2195 = scalar_lea.sflag [#allocation4], 1
    %2196 = vsyncpa %s2195, 1

</llo_original>
